<compile_context>
chip_gen: v7x
topology: tpu7x:2x2x1
jax: 0.10.0
libtpu: 0.0.40
codegen_flags: <defaults>
</compile_context>

<pallas_src>
import functools

import jax
import jax.numpy as jnp
import numpy as np
from jax.experimental import pallas as pl
from jax.experimental.pallas import tpu as pltpu


def _round_up(x, m):
    return ((x + m - 1) // m) * m


# --------------------------------- kernel -----------------------------------

def _confidence_kernel(
    x_ref, c_ref,
    hgu_w, hgu_b,     # fused hidden gate|up:           (Hp, 2Ip) bf16, (1, 2Ip) f32
    hdu_w, hdu_b,     # fused hidden (down @ up_proj):  (Ip, Cp)  bf16, (1, Cp)  f32
    cgu_w, cgu_b,     # fused concept gate|up:          (Cp, 2Ip) bf16, (1, 2Ip) f32
    cdn_w, cdn_b,     # concept down:                   (Ip, Cp)  bf16, (1, Cp)  f32
    o_ref,            # (1, tile) lane-dense scores
    *, inner_dim,     # Ip, a multiple of 128
):
    f32 = jnp.float32
    wdt = hgu_w.dtype   # matmul compute dtype (bfloat16)

    def gated_mlp(inp_ref, gu_w, gu_b, dn_w, dn_b):
        a = inp_ref[...].astype(wdt)                                          # (T, F) bf16
        gu = jnp.dot(a, gu_w[...], preferred_element_type=f32) + gu_b[...]    # (T, 2Ip) f32
        # Lane-aligned SwiGLU: inner_dim % 128 == 0, so both halves are static
        # full-vreg lane slices (no roll, no masking, no garbage lanes).
        z = jax.nn.silu(gu[:, :inner_dim]) * gu[:, inner_dim:]                # (T, Ip) f32
        return jnp.dot(z.astype(wdt), dn_w[...],
                       preferred_element_type=f32) + dn_b[...]                # (T, Cp) f32

    h = gated_mlp(x_ref, hgu_w, hgu_b, hdu_w, hdu_b)    # hidden path  -> (T, Cp)
    ce = gated_mlp(c_ref, cgu_w, cgu_b, cdn_w, cdn_b)   # concept path -> (T, Cp)

    # Row-wise dot over the (padded) concept dim, emitted lane-dense:
    # (1, Cp) x (T, Cp) -> (1, T).  Product cast to bf16 to halve any implicit
    # transpose / XLU traffic; accumulation stays f32 on the MXU.
    prod = (h * ce).astype(wdt)                          # (T, Cp) bf16
    ones_row = jnp.ones((1, prod.shape[-1]), wdt)
    score = jax.lax.dot_general(
        ones_row, prod,
        dimension_numbers=(((1,), (1,)), ((), ())),
        preferred_element_type=f32)                      # (1, T)
    o_ref[...] = score.astype(o_ref.dtype)


# -------------------------------- wrapper ------------------------------------

def _make_call(kernel, tile, Mp, Hp, Cp, out_dtype, params, vmem_limit,
               single_buffer_weights):
    def weight_spec(arr):
        # Whole (small) parameter tensor resident every grid step; constant
        # index_map, so single-buffering costs nothing and halves weight VMEM.
        kwargs = {}
        if single_buffer_weights:
            kwargs["pipeline_mode"] = pl.Buffered(1)
        return pl.BlockSpec(arr.shape, lambda i: (0, 0), **kwargs)

    in_specs = [
        pl.BlockSpec((tile, Hp), lambda i: (i, 0)),   # encoder hidden-state rows (bf16)
        pl.BlockSpec((tile, Cp), lambda i: (i, 0)),   # concept token rows (bf16)
    ] + [weight_spec(p) for p in params]

    # Lane-dense output: one (1, tile) full-width vector-store block per step.
    out_spec = pl.BlockSpec((1, tile), lambda i: (0, i))

    return pl.pallas_call(
        kernel,
        out_shape=jax.ShapeDtypeStruct((1, Mp), out_dtype),
        grid_spec=pltpu.PrefetchScalarGridSpec(
            num_scalar_prefetch=0,
            grid=(Mp // tile,),
            in_specs=in_specs,
            out_specs=out_spec,
        ),
        # Row-parallel grid: shards across both TensorCores on v7x (weights are
        # replicated per-TC -> budget VMEM per-TC); neutral on v5e/v6e.
        compiler_params=pltpu.CompilerParams(
            dimension_semantics=("parallel",),
            vmem_limit_bytes=vmem_limit,
        ),
    )


def confidence_module_forward(enc, concept, prepared_params, *, tile_rows=512):
    """enc: (B, S, H), concept: (B, S, C)  ->  (B, S, 1)

    tile_rows: token rows per grid step.  512 is a good default on v5e/v6e
    (128 MiB VMEM); prefer 256 on v7x (64 MiB per TensorCore) for large
    hidden/inner dims.
    """
    B, S, H = enc.shape
    C = concept.shape[-1]
    M = B * S
    out_dtype = enc.dtype

    hgu_w, hgu_b, hdu_w, hdu_b, cgu_w, cgu_b, cdn_w, cdn_b = prepared_params
    Hp = hgu_w.shape[0]
    Cp = cgu_w.shape[0]
    Ip = hgu_w.shape[1] // 2
    wdt = hgu_w.dtype

    assert tile_rows % 128 == 0 and tile_rows >= 128
    tile = min(tile_rows, _round_up(M, 128))     # multiple of 128 (lane-dense out)
    Mp = _round_up(M, tile)

    # bf16 activation streams (half the DMA bytes of f32); zero row/col padding.
    x2d = enc.reshape(M, H).astype(wdt)
    c2d = concept.reshape(M, C).astype(wdt)
    if (Mp, Hp) != (M, H):
        x2d = jnp.pad(x2d, ((0, Mp - M), (0, Hp - H)))
    if (Mp, Cp) != (M, C):
        c2d = jnp.pad(c2d, ((0, Mp - M), (0, Cp - C)))

    # VMEM budget: single-buffered weights + double-buffered activation/output
    # tiles + f32 intermediates, with headroom.  Never below the 32 MiB scoped
    # default; capped at 64 MiB so it is safe per-TensorCore on v7x.
    param_bytes = sum(int(p.size) * p.dtype.itemsize for p in prepared_params)
    est = (param_bytes
           + 2 * tile * (Hp + Cp) * x2d.dtype.itemsize       # input double-buffers
           + 2 * tile * jnp.zeros((), out_dtype).dtype.itemsize
           + 2 * tile * (3 * Ip + 2 * Cp) * 4)                # f32 gu/z/head temporaries
    vmem_limit = min(max(int(1.5 * est) + (1 << 20), 32 * 1024 * 1024),
                     64 * 1024 * 1024)

    kernel = functools.partial(_confidence_kernel, inner_dim=Ip)
    try:
        call = _make_call(kernel, tile, Mp, Hp, Cp, out_dtype, prepared_params,
                          vmem_limit, single_buffer_weights=True)
        out_row = call(x2d, c2d, *prepared_params)
    except Exception:
        # TODO(synk): pl.Buffered(1) (single-buffered resident weights) rejected
        # by this JAX version; falling back to default double-buffering.
        call = _make_call(kernel, tile, Mp, Hp, Cp, out_dtype, prepared_params,
                          vmem_limit, single_buffer_weights=False)
        out_row = call(x2d, c2d, *prepared_params)

    return out_row[0, :M].reshape(B, S, 1)


# ---------------------------- parameter handling ------------------------------

def _linear_params(key, fan_in, fan_out, dtype=jnp.float32):
    # matches torch nn.Linear default init: U(-1/sqrt(fan_in), 1/sqrt(fan_in))
    kw, kb = jax.random.split(key)
    bound = 1.0 / np.sqrt(fan_in)
    w = jax.random.uniform(kw, (fan_in, fan_out), dtype, -bound, bound)
    b = jax.random.uniform(kb, (1, fan_out), dtype, -bound, bound)
    return w, b


def init_confidence_params(key, hidden_dim, concept_dim, inner_dim, dtype=jnp.float32):
    """Raw params, 1:1 with the PyTorch module's Linear layers."""
    keys = jax.random.split(key, 7)
    hg_w, hg_b = _linear_params(keys[0], hidden_dim, inner_dim, dtype)    # hidden gate
    hu_w, hu_b = _linear_params(keys[1], hidden_dim, inner_dim, dtype)    # hidden up
    hd_w, hd_b = _linear_params(keys[2], inner_dim, hidden_dim, dtype)    # hidden down
    up_w, up_b = _linear_params(keys[3], hidden_dim, concept_dim, dtype)  # hidden_state_up_proj
    cg_w, cg_b = _linear_params(keys[4], concept_dim, inner_dim, dtype)   # concept gate
    cu_w, cu_b = _linear_params(keys[5], concept_dim, inner_dim, dtype)   # concept up
    cd_w, cd_b = _linear_params(keys[6], inner_dim, concept_dim, dtype)   # concept down
    return (hg_w, hg_b, hu_w, hu_b, hd_w, hd_b,
            up_w, up_b,
            cg_w, cg_b, cu_w, cu_b, cd_w, cd_b)


def prepare_confidence_params(params, compute_dtype=jnp.bfloat16, align=128):
    """Offline fusion, lane-alignment padding and dtype cast (one-time cost).

    * gate|up weights concatenated into one (in, 2*inner) matmul.
    * hidden down_proj and hidden_state_up_proj algebraically fused:
        (z @ hd_w + hd_b) @ up_w + up_b == z @ (hd_w @ up_w) + (hd_b @ up_w + up_b)
      (documented: rounding path differs slightly from bit-exact PyTorch).
    * H, C, inner zero-padded to multiples of `align` (128; 256 gives cleaner MXU
      cadence on v6e/v7x).  Zero padding is exact: padded gate/up lanes are 0,
      silu(0)*0 == 0, padded output columns are 0, so results are unchanged and
      there is no inf*0 NaN hazard.
    * weights -> compute_dtype (bf16); biases stay f32.
    """
    (hg_w, hg_b, hu_w, hu_b, hd_w, hd_b,
     up_w, up_b,
     cg_w, cg_b, cu_w, cu_b, cd_w, cd_b) = params
    f32 = jnp.float32
    H, I = hg_w.shape
    C = up_w.shape[1]
    Hp, Cp, Ip = _round_up(H, align), _round_up(C, align), _round_up(I, align)

    def pad2(a, rows, cols):
        a = jnp.asarray(a, f32)
        return jnp.pad(a, ((0, rows - a.shape[0]), (0, cols - a.shape[1])))

    # hidden gate|up: (Hp, 2Ip); gate lanes [0, Ip), up lanes [Ip, 2Ip)
    hgu_w = jnp.concatenate([pad2(hg_w, Hp, Ip), pad2(hu_w, Hp, Ip)], axis=1)
    hgu_b = jnp.concatenate([pad2(hg_b, 1, Ip), pad2(hu_b, 1, Ip)], axis=1)
    # hidden (down @ up_proj) fusion: (Ip, Cp)
    hdu_w = pad2(jnp.asarray(hd_w, f32) @ jnp.asarray(up_w, f32), Ip, Cp)
    hdu_b = pad2(jnp.asarray(hd_b, f32) @ jnp.asarray(up_w, f32)
                 + jnp.asarray(up_b, f32), 1, Cp)
    # concept gate|up: (Cp, 2Ip)
    cgu_w = jnp.concatenate([pad2(cg_w, Cp, Ip), pad2(cu_w, Cp, Ip)], axis=1)
    cgu_b = jnp.concatenate([pad2(cg_b, 1, Ip), pad2(cu_b, 1, Ip)], axis=1)
    # concept down: (Ip, Cp)
    cdn_w = pad2(cd_w, Ip, Cp)
    cdn_b = pad2(cd_b, 1, Cp)

    return (hgu_w.astype(compute_dtype), hgu_b,
            hdu_w.astype(compute_dtype), hdu_b,
            cgu_w.astype(compute_dtype), cgu_b,
            cdn_w.astype(compute_dtype), cdn_b)


# ------------------------------- pure-JAX refs --------------------------------

def _ref_forward_fp32(enc, concept, raw_params):
    """Exact (f32, unfused) reference matching the PyTorch module."""
    (hg_w, hg_b, hu_w, hu_b, hd_w, hd_b,
     up_w, up_b,
     cg_w, cg_b, cu_w, cu_b, cd_w, cd_b) = raw_params
    x = enc.astype(jnp.float32)
    h = jax.nn.silu(x @ hg_w + hg_b) * (x @ hu_w + hu_b)
    h = h @ hd_w + hd_b
    h = h @ up_w + up_b
    c = concept.astype(jnp.float32)
    ce = jax.nn.silu(c @ cg_w + cg_b) * (c @ cu_w + cu_b)
    ce = ce @ cd_w + cd_b
    return jnp.sum(h * ce, axis=-1, keepdims=True).astype(enc.dtype)


def _ref_forward_prepared(enc, concept, prepared):
    """Mixed-precision reference mirroring the kernel's fused/padded bf16 math."""
    hgu_w, hgu_b, hdu_w, hdu_b, cgu_w, cgu_b, cdn_w, cdn_b = prepared
    f32 = jnp.float32
    wdt = hgu_w.dtype
    Hp, Cp, Ip = hgu_w.shape[0], cgu_w.shape[0], hgu_w.shape[1] // 2
    B, S, H = enc.shape
    C = concept.shape[-1]

    x = jnp.pad(enc.reshape(-1, H).astype(wdt), ((0, 0), (0, Hp - H)))
    c = jnp.pad(concept.reshape(-1, C).astype(wdt), ((0, 0), (0, Cp - C)))

    def gated_mlp(a, gu_w, gu_b, dn_w, dn_b):
        gu = jnp.dot(a, gu_w, preferred_element_type=f32) + gu_b
        z = jax.nn.silu(gu[:, :Ip]) * gu[:, Ip:]
        return jnp.dot(z.astype(wdt), dn_w, preferred_element_type=f32) + dn_b

    h = gated_mlp(x, hgu_w, hgu_b, hdu_w, hdu_b)
    ce = gated_mlp(c, cgu_w, cgu_b, cdn_w, cdn_b)
    prod = (h * ce).astype(wdt).astype(f32)
    score = jnp.sum(prod, axis=-1, keepdims=True)
    return score.reshape(B, S, 1).astype(enc.dtype)


# ----------------------------------- demo --------------------------------------

if __name__ == "__main__":
    B, S = 2, 8
    hidden_dim, concept_dim, inner_dim = 32, 16, 64

    key = jax.random.PRNGKey(0)
    k_enc, k_con, k_par = jax.random.split(key, 3)

    enc = jax.random.normal(k_enc, (B, S, hidden_dim), jnp.float32)
    concept = jax.random.normal(k_con, (B, S, concept_dim), jnp.float32)

    raw_params = init_confidence_params(k_par, hidden_dim, concept_dim, inner_dim)
    params = prepare_confidence_params(raw_params, compute_dtype=jnp.bfloat16)

    out = confidence_module_forward(enc, concept, params)
    out = jax.block_until_ready(out)
    assert out.shape == (B, S, 1)

    # Tight check vs a reference mirroring the kernel's fused/padded bf16 math.
    ref_mixed = _ref_forward_prepared(enc, concept, params)
    np.testing.assert_allclose(np.asarray(out), np.asarray(ref_mixed),
                               rtol=1e-2, atol=1e-2)

    # Looser check vs the exact f32 PyTorch-equivalent math (bf16 weights +
    # down/up_proj pre-fusion differ only at rounding level for these dims).
    ref_f32 = _ref_forward_fp32(enc, concept, raw_params)
    np.testing.assert_allclose(np.asarray(out), np.asarray(ref_f32),
                               rtol=5e-2, atol=5e-2)

    # Multi-tile / row-padding path: more tokens, 128-row tiles, 4 grid steps.
    B2, S2 = 2, 200
    enc2 = jax.random.normal(jax.random.PRNGKey(1), (B2, S2, hidden_dim), jnp.float32)
    con2 = jax.random.normal(jax.random.PRNGKey(2), (B2, S2, concept_dim), jnp.float32)
    out2 = jax.block_until_ready(
        confidence_module_forward(enc2, con2, params, tile_rows=128))
    np.testing.assert_allclose(np.asarray(out2),
                               np.asarray(_ref_forward_prepared(enc2, con2, params)),
                               rtol=1e-2, atol=1e-2)

    print("KERNEL_OK")
</pallas_src>

<mosaic_0001>
module attributes {stable_mosaic.version = 11 : i64} {
  func.func @_confidence_kernel(%arg0: i32, %arg1: memref<128x128xbf16, #tpu.memory_space<vmem>>, %arg2: memref<128x128xbf16, #tpu.memory_space<vmem>>, %arg3: memref<128x256xbf16, #tpu.memory_space<vmem>>, %arg4: memref<1x256xf32, #tpu.memory_space<vmem>>, %arg5: memref<128x128xbf16, #tpu.memory_space<vmem>>, %arg6: memref<1x128xf32, #tpu.memory_space<vmem>>, %arg7: memref<128x256xbf16, #tpu.memory_space<vmem>>, %arg8: memref<1x256xf32, #tpu.memory_space<vmem>>, %arg9: memref<128x128xbf16, #tpu.memory_space<vmem>>, %arg10: memref<1x128xf32, #tpu.memory_space<vmem>>, %arg11: memref<1x128xf32, #tpu.memory_space<vmem>>) attributes {dimension_semantics = [#tpu.dimension_semantics<parallel>], iteration_bounds = array<i64: 1>, scalar_prefetch = 0 : i64, scratch_operands = 0 : i64, tpu.core_type = #tpu.core_type<tc>, window_params = [{transform_indices = @transform_0, window_bounds = array<i64: 128, 128>}, {transform_indices = @transform_1, window_bounds = array<i64: 128, 128>}, {pipeline_mode = #tpu.pipeline_mode<synchronous>, transform_indices = @transform_2, window_bounds = array<i64: 128, 256>}, {pipeline_mode = #tpu.pipeline_mode<synchronous>, transform_indices = @transform_3, window_bounds = array<i64: 1, 256>}, {pipeline_mode = #tpu.pipeline_mode<synchronous>, transform_indices = @transform_4, window_bounds = array<i64: 128, 128>}, {pipeline_mode = #tpu.pipeline_mode<synchronous>, transform_indices = @transform_5, window_bounds = array<i64: 1, 128>}, {pipeline_mode = #tpu.pipeline_mode<synchronous>, transform_indices = @transform_6, window_bounds = array<i64: 128, 256>}, {pipeline_mode = #tpu.pipeline_mode<synchronous>, transform_indices = @transform_7, window_bounds = array<i64: 1, 256>}, {pipeline_mode = #tpu.pipeline_mode<synchronous>, transform_indices = @transform_8, window_bounds = array<i64: 128, 128>}, {pipeline_mode = #tpu.pipeline_mode<synchronous>, transform_indices = @transform_9, window_bounds = array<i64: 1, 128>}, {transform_indices = @transform_10, window_bounds = array<i64: 1, 128>}]} {
    %c0 = arith.constant 0 : index
    %c0_0 = arith.constant 0 : index
    %0 = vector.load %arg1[%c0, %c0_0] : memref<128x128xbf16, #tpu.memory_space<vmem>>, vector<128x128xbf16>
    %c0_1 = arith.constant 0 : index
    %c0_2 = arith.constant 0 : index
    %1 = vector.load %arg3[%c0_1, %c0_2] : memref<128x256xbf16, #tpu.memory_space<vmem>>, vector<128x256xbf16>
    %cst = arith.constant dense<0.000000e+00> : vector<128x256xf32>
    %2 = tpu.matmul %0, %1, %cst {dimension_numbers = #tpu.dot_dimension_numbers<[1], [0], [0], [1], [0, 0, 1, 1], [], []>} : vector<128x128xbf16>, vector<128x256xbf16>, vector<128x256xf32> -> vector<128x256xf32>
    %c0_3 = arith.constant 0 : index
    %c0_4 = arith.constant 0 : index
    %3 = vector.load %arg4[%c0_3, %c0_4] : memref<1x256xf32, #tpu.memory_space<vmem>>, vector<1x256xf32>
    %4 = vector.broadcast %3 : vector<1x256xf32> to vector<128x256xf32>
    %5 = arith.addf %2, %4 : vector<128x256xf32>
    %6 = vector.extract_strided_slice %5 {offsets = [0, 0], sizes = [128, 128], strides = [1, 1]} : vector<128x256xf32> to vector<128x128xf32>
    %7 = arith.negf %6 : vector<128x128xf32>
    %8 = math.exp %7 : vector<128x128xf32>
    %cst_5 = arith.constant 1.000000e+00 : f32
    %9 = vector.broadcast %cst_5 : f32 to vector<128x128xf32>
    %10 = arith.addf %9, %8 : vector<128x128xf32>
    %11 = arith.divf %9, %10 : vector<128x128xf32>
    %12 = arith.mulf %6, %11 : vector<128x128xf32>
    %13 = vector.extract_strided_slice %5 {offsets = [0, 128], sizes = [128, 128], strides = [1, 1]} : vector<128x256xf32> to vector<128x128xf32>
    %14 = arith.mulf %12, %13 : vector<128x128xf32>
    %15 = arith.truncf %14 : vector<128x128xf32> to vector<128x128xbf16>
    %c0_6 = arith.constant 0 : index
    %c0_7 = arith.constant 0 : index
    %16 = vector.load %arg5[%c0_6, %c0_7] : memref<128x128xbf16, #tpu.memory_space<vmem>>, vector<128x128xbf16>
    %cst_8 = arith.constant dense<0.000000e+00> : vector<128x128xf32>
    %17 = tpu.matmul %15, %16, %cst_8 {dimension_numbers = #tpu.dot_dimension_numbers<[1], [0], [0], [1], [0, 0, 1, 1], [], []>} : vector<128x128xbf16>, vector<128x128xbf16>, vector<128x128xf32> -> vector<128x128xf32>
    %c0_9 = arith.constant 0 : index
    %c0_10 = arith.constant 0 : index
    %18 = vector.load %arg6[%c0_9, %c0_10] : memref<1x128xf32, #tpu.memory_space<vmem>>, vector<1x128xf32>
    %19 = vector.broadcast %18 : vector<1x128xf32> to vector<128x128xf32>
    %20 = arith.addf %17, %19 : vector<128x128xf32>
    %c0_11 = arith.constant 0 : index
    %c0_12 = arith.constant 0 : index
    %21 = vector.load %arg2[%c0_11, %c0_12] : memref<128x128xbf16, #tpu.memory_space<vmem>>, vector<128x128xbf16>
    %c0_13 = arith.constant 0 : index
    %c0_14 = arith.constant 0 : index
    %22 = vector.load %arg7[%c0_13, %c0_14] : memref<128x256xbf16, #tpu.memory_space<vmem>>, vector<128x256xbf16>
    %cst_15 = arith.constant dense<0.000000e+00> : vector<128x256xf32>
    %23 = tpu.matmul %21, %22, %cst_15 {dimension_numbers = #tpu.dot_dimension_numbers<[1], [0], [0], [1], [0, 0, 1, 1], [], []>} : vector<128x128xbf16>, vector<128x256xbf16>, vector<128x256xf32> -> vector<128x256xf32>
    %c0_16 = arith.constant 0 : index
    %c0_17 = arith.constant 0 : index
    %24 = vector.load %arg8[%c0_16, %c0_17] : memref<1x256xf32, #tpu.memory_space<vmem>>, vector<1x256xf32>
    %25 = vector.broadcast %24 : vector<1x256xf32> to vector<128x256xf32>
    %26 = arith.addf %23, %25 : vector<128x256xf32>
    %27 = vector.extract_strided_slice %26 {offsets = [0, 0], sizes = [128, 128], strides = [1, 1]} : vector<128x256xf32> to vector<128x128xf32>
    %28 = arith.negf %27 : vector<128x128xf32>
    %29 = math.exp %28 : vector<128x128xf32>
    %cst_18 = arith.constant 1.000000e+00 : f32
    %30 = vector.broadcast %cst_18 : f32 to vector<128x128xf32>
    %31 = arith.addf %30, %29 : vector<128x128xf32>
    %32 = arith.divf %30, %31 : vector<128x128xf32>
    %33 = arith.mulf %27, %32 : vector<128x128xf32>
    %34 = vector.extract_strided_slice %26 {offsets = [0, 128], sizes = [128, 128], strides = [1, 1]} : vector<128x256xf32> to vector<128x128xf32>
    %35 = arith.mulf %33, %34 : vector<128x128xf32>
    %36 = arith.truncf %35 : vector<128x128xf32> to vector<128x128xbf16>
    %c0_19 = arith.constant 0 : index
    %c0_20 = arith.constant 0 : index
    %37 = vector.load %arg9[%c0_19, %c0_20] : memref<128x128xbf16, #tpu.memory_space<vmem>>, vector<128x128xbf16>
    %cst_21 = arith.constant dense<0.000000e+00> : vector<128x128xf32>
    %38 = tpu.matmul %36, %37, %cst_21 {dimension_numbers = #tpu.dot_dimension_numbers<[1], [0], [0], [1], [0, 0, 1, 1], [], []>} : vector<128x128xbf16>, vector<128x128xbf16>, vector<128x128xf32> -> vector<128x128xf32>
    %c0_22 = arith.constant 0 : index
    %c0_23 = arith.constant 0 : index
    %39 = vector.load %arg10[%c0_22, %c0_23] : memref<1x128xf32, #tpu.memory_space<vmem>>, vector<1x128xf32>
    %40 = vector.broadcast %39 : vector<1x128xf32> to vector<128x128xf32>
    %41 = arith.addf %38, %40 : vector<128x128xf32>
    %42 = arith.mulf %20, %41 : vector<128x128xf32>
    %43 = arith.truncf %42 : vector<128x128xf32> to vector<128x128xbf16>
    %cst_24 = arith.constant 1.000000e+00 : bf16
    %44 = vector.broadcast %cst_24 : bf16 to vector<1x128xbf16>
    %cst_25 = arith.constant dense<0.000000e+00> : vector<1x128xf32>
    %45 = tpu.matmul %44, %43, %cst_25 {dimension_numbers = #tpu.dot_dimension_numbers<[1], [1], [0], [0], [0, 0, 1, 0], [], []>} : vector<1x128xbf16>, vector<128x128xbf16>, vector<1x128xf32> -> vector<1x128xf32>
    %c0_26 = arith.constant 0 : index
    %c0_27 = arith.constant 0 : index
    %46 = vector.load %arg11[%c0_26, %c0_27] : memref<1x128xf32, #tpu.memory_space<vmem>>, vector<1x128xf32>
    tpu.vector_store %arg11[%c0_26, %c0_27], %45 {strides = array<i32>} : memref<1x128xf32, #tpu.memory_space<vmem>>, vector<1x128xf32>,
    return
  }
  func.func @transform_0(%arg0: i32) -> (i32, i32) {
    %c0_i32 = arith.constant 0 : i32
    %c0_i32_0 = arith.constant 0 : i32
    return %arg0, %c0_i32 : i32, i32
  }
  func.func @transform_1(%arg0: i32) -> (i32, i32) {
    %c0_i32 = arith.constant 0 : i32
    %c0_i32_0 = arith.constant 0 : i32
    return %arg0, %c0_i32 : i32, i32
  }
  func.func @transform_2(%arg0: i32) -> (i32, i32) {
    %c0_i32 = arith.constant 0 : i32
    %c0_i32_0 = arith.constant 0 : i32
    %c0_i32_1 = arith.constant 0 : i32
    return %c0_i32, %c0_i32_0 : i32, i32
  }
  func.func @transform_3(%arg0: i32) -> (i32, i32) {
    %c0_i32 = arith.constant 0 : i32
    %c0_i32_0 = arith.constant 0 : i32
    %c0_i32_1 = arith.constant 0 : i32
    return %c0_i32, %c0_i32_0 : i32, i32
  }
  func.func @transform_4(%arg0: i32) -> (i32, i32) {
    %c0_i32 = arith.constant 0 : i32
    %c0_i32_0 = arith.constant 0 : i32
    %c0_i32_1 = arith.constant 0 : i32
    return %c0_i32, %c0_i32_0 : i32, i32
  }
  func.func @transform_5(%arg0: i32) -> (i32, i32) {
    %c0_i32 = arith.constant 0 : i32
    %c0_i32_0 = arith.constant 0 : i32
    %c0_i32_1 = arith.constant 0 : i32
    return %c0_i32, %c0_i32_0 : i32, i32
  }
  func.func @transform_6(%arg0: i32) -> (i32, i32) {
    %c0_i32 = arith.constant 0 : i32
    %c0_i32_0 = arith.constant 0 : i32
    %c0_i32_1 = arith.constant 0 : i32
    return %c0_i32, %c0_i32_0 : i32, i32
  }
  func.func @transform_7(%arg0: i32) -> (i32, i32) {
    %c0_i32 = arith.constant 0 : i32
    %c0_i32_0 = arith.constant 0 : i32
    %c0_i32_1 = arith.constant 0 : i32
    return %c0_i32, %c0_i32_0 : i32, i32
  }
  func.func @transform_8(%arg0: i32) -> (i32, i32) {
    %c0_i32 = arith.constant 0 : i32
    %c0_i32_0 = arith.constant 0 : i32
    %c0_i32_1 = arith.constant 0 : i32
    return %c0_i32, %c0_i32_0 : i32, i32
  }
  func.func @transform_9(%arg0: i32) -> (i32, i32) {
    %c0_i32 = arith.constant 0 : i32
    %c0_i32_0 = arith.constant 0 : i32
    %c0_i32_1 = arith.constant 0 : i32
    return %c0_i32, %c0_i32_0 : i32, i32
  }
  func.func @transform_10(%arg0: i32) -> (i32, i32) {
    %c0_i32 = arith.constant 0 : i32
    %c0_i32_0 = arith.constant 0 : i32
    return %c0_i32, %arg0 : i32, i32
  }
}

module attributes {stable_mosaic.version = 11 : i64} {
  func.func @_confidence_kernel(%arg0: i32, %arg1: memref<128x128xbf16, #tpu.memory_space<vmem>>, %arg2: memref<128x128xbf16, #tpu.memory_space<vmem>>, %arg3: memref<128x256xbf16, #tpu.memory_space<vmem>>, %arg4: memref<1x256xf32, #tpu.memory_space<vmem>>, %arg5: memref<128x128xbf16, #tpu.memory_space<vmem>>, %arg6: memref<1x128xf32, #tpu.memory_space<vmem>>, %arg7: memref<128x256xbf16, #tpu.memory_space<vmem>>, %arg8: memref<1x256xf32, #tpu.memory_space<vmem>>, %arg9: memref<128x128xbf16, #tpu.memory_space<vmem>>, %arg10: memref<1x128xf32, #tpu.memory_space<vmem>>, %arg11: memref<1x128xf32, #tpu.memory_space<vmem>>) attributes {dimension_semantics = [#tpu.dimension_semantics<parallel>], iteration_bounds = array<i64: 1>, scalar_prefetch = 0 : i64, scratch_operands = 0 : i64, tpu.core_type = #tpu.core_type<tc>, window_params = [{transform_indices = @transform_0, window_bounds = array<i64: 128, 128>}, {transform_indices = @transform_1, window_bounds = array<i64: 128, 128>}, {pipeline_mode = #tpu.pipeline_mode<synchronous>, transform_indices = @transform_2, window_bounds = array<i64: 128, 256>}, {pipeline_mode = #tpu.pipeline_mode<synchronous>, transform_indices = @transform_3, window_bounds = array<i64: 1, 256>}, {pipeline_mode = #tpu.pipeline_mode<synchronous>, transform_indices = @transform_4, window_bounds = array<i64: 128, 128>}, {pipeline_mode = #tpu.pipeline_mode<synchronous>, transform_indices = @transform_5, window_bounds = array<i64: 1, 128>}, {pipeline_mode = #tpu.pipeline_mode<synchronous>, transform_indices = @transform_6, window_bounds = array<i64: 128, 256>}, {pipeline_mode = #tpu.pipeline_mode<synchronous>, transform_indices = @transform_7, window_bounds = array<i64: 1, 256>}, {pipeline_mode = #tpu.pipeline_mode<synchronous>, transform_indices = @transform_8, window_bounds = array<i64: 128, 128>}, {pipeline_mode = #tpu.pipeline_mode<synchronous>, transform_indices = @transform_9, window_bounds = array<i64: 1, 128>}, {transform_indices = @transform_10, window_bounds = array<i64: 1, 128>}]} {
    %c0 = arith.constant 0 : index
    %c0_0 = arith.constant 0 : index
    %0 = vector.load %arg1[%c0, %c0_0] : memref<128x128xbf16, #tpu.memory_space<vmem>>, vector<128x128xbf16>
    %c0_1 = arith.constant 0 : index
    %c0_2 = arith.constant 0 : index
    %1 = vector.load %arg3[%c0_1, %c0_2] : memref<128x256xbf16, #tpu.memory_space<vmem>>, vector<128x256xbf16>
    %cst = arith.constant dense<0.000000e+00> : vector<128x256xf32>
    %2 = tpu.matmul %0, %1, %cst {dimension_numbers = #tpu.dot_dimension_numbers<[1], [0], [0], [1], [0, 0, 1, 1], [], []>} : vector<128x128xbf16>, vector<128x256xbf16>, vector<128x256xf32> -> vector<128x256xf32>
    %c0_3 = arith.constant 0 : index
    %c0_4 = arith.constant 0 : index
    %3 = vector.load %arg4[%c0_3, %c0_4] : memref<1x256xf32, #tpu.memory_space<vmem>>, vector<1x256xf32>
    %4 = vector.broadcast %3 : vector<1x256xf32> to vector<128x256xf32>
    %5 = arith.addf %2, %4 : vector<128x256xf32>
    %6 = vector.extract_strided_slice %5 {offsets = [0, 0], sizes = [128, 128], strides = [1, 1]} : vector<128x256xf32> to vector<128x128xf32>
    %7 = arith.negf %6 : vector<128x128xf32>
    %8 = math.exp %7 : vector<128x128xf32>
    %cst_5 = arith.constant 1.000000e+00 : f32
    %9 = vector.broadcast %cst_5 : f32 to vector<128x128xf32>
    %10 = arith.addf %9, %8 : vector<128x128xf32>
    %11 = arith.divf %9, %10 : vector<128x128xf32>
    %12 = arith.mulf %6, %11 : vector<128x128xf32>
    %13 = vector.extract_strided_slice %5 {offsets = [0, 128], sizes = [128, 128], strides = [1, 1]} : vector<128x256xf32> to vector<128x128xf32>
    %14 = arith.mulf %12, %13 : vector<128x128xf32>
    %15 = arith.truncf %14 : vector<128x128xf32> to vector<128x128xbf16>
    %c0_6 = arith.constant 0 : index
    %c0_7 = arith.constant 0 : index
    %16 = vector.load %arg5[%c0_6, %c0_7] : memref<128x128xbf16, #tpu.memory_space<vmem>>, vector<128x128xbf16>
    %cst_8 = arith.constant dense<0.000000e+00> : vector<128x128xf32>
    %17 = tpu.matmul %15, %16, %cst_8 {dimension_numbers = #tpu.dot_dimension_numbers<[1], [0], [0], [1], [0, 0, 1, 1], [], []>} : vector<128x128xbf16>, vector<128x128xbf16>, vector<128x128xf32> -> vector<128x128xf32>
    %c0_9 = arith.constant 0 : index
    %c0_10 = arith.constant 0 : index
    %18 = vector.load %arg6[%c0_9, %c0_10] : memref<1x128xf32, #tpu.memory_space<vmem>>, vector<1x128xf32>
    %19 = vector.broadcast %18 : vector<1x128xf32> to vector<128x128xf32>
    %20 = arith.addf %17, %19 : vector<128x128xf32>
    %c0_11 = arith.constant 0 : index
    %c0_12 = arith.constant 0 : index
    %21 = vector.load %arg2[%c0_11, %c0_12] : memref<128x128xbf16, #tpu.memory_space<vmem>>, vector<128x128xbf16>
    %c0_13 = arith.constant 0 : index
    %c0_14 = arith.constant 0 : index
    %22 = vector.load %arg7[%c0_13, %c0_14] : memref<128x256xbf16, #tpu.memory_space<vmem>>, vector<128x256xbf16>
    %cst_15 = arith.constant dense<0.000000e+00> : vector<128x256xf32>
    %23 = tpu.matmul %21, %22, %cst_15 {dimension_numbers = #tpu.dot_dimension_numbers<[1], [0], [0], [1], [0, 0, 1, 1], [], []>} : vector<128x128xbf16>, vector<128x256xbf16>, vector<128x256xf32> -> vector<128x256xf32>
    %c0_16 = arith.constant 0 : index
    %c0_17 = arith.constant 0 : index
    %24 = vector.load %arg8[%c0_16, %c0_17] : memref<1x256xf32, #tpu.memory_space<vmem>>, vector<1x256xf32>
    %25 = vector.broadcast %24 : vector<1x256xf32> to vector<128x256xf32>
    %26 = arith.addf %23, %25 : vector<128x256xf32>
    %27 = vector.extract_strided_slice %26 {offsets = [0, 0], sizes = [128, 128], strides = [1, 1]} : vector<128x256xf32> to vector<128x128xf32>
    %28 = arith.negf %27 : vector<128x128xf32>
    %29 = math.exp %28 : vector<128x128xf32>
    %cst_18 = arith.constant 1.000000e+00 : f32
    %30 = vector.broadcast %cst_18 : f32 to vector<128x128xf32>
    %31 = arith.addf %30, %29 : vector<128x128xf32>
    %32 = arith.divf %30, %31 : vector<128x128xf32>
    %33 = arith.mulf %27, %32 : vector<128x128xf32>
    %34 = vector.extract_strided_slice %26 {offsets = [0, 128], sizes = [128, 128], strides = [1, 1]} : vector<128x256xf32> to vector<128x128xf32>
    %35 = arith.mulf %33, %34 : vector<128x128xf32>
    %36 = arith.truncf %35 : vector<128x128xf32> to vector<128x128xbf16>
    %c0_19 = arith.constant 0 : index
    %c0_20 = arith.constant 0 : index
    %37 = vector.load %arg9[%c0_19, %c0_20] : memref<128x128xbf16, #tpu.memory_space<vmem>>, vector<128x128xbf16>
    %cst_21 = arith.constant dense<0.000000e+00> : vector<128x128xf32>
    %38 = tpu.matmul %36, %37, %cst_21 {dimension_numbers = #tpu.dot_dimension_numbers<[1], [0], [0], [1], [0, 0, 1, 1], [], []>} : vector<128x128xbf16>, vector<128x128xbf16>, vector<128x128xf32> -> vector<128x128xf32>
    %c0_22 = arith.constant 0 : index
    %c0_23 = arith.constant 0 : index
    %39 = vector.load %arg10[%c0_22, %c0_23] : memref<1x128xf32, #tpu.memory_space<vmem>>, vector<1x128xf32>
    %40 = vector.broadcast %39 : vector<1x128xf32> to vector<128x128xf32>
    %41 = arith.addf %38, %40 : vector<128x128xf32>
    %42 = arith.mulf %20, %41 : vector<128x128xf32>
    %43 = arith.truncf %42 : vector<128x128xf32> to vector<128x128xbf16>
    %cst_24 = arith.constant 1.000000e+00 : bf16
    %44 = vector.broadcast %cst_24 : bf16 to vector<1x128xbf16>
    %cst_25 = arith.constant dense<0.000000e+00> : vector<1x128xf32>
    %45 = tpu.matmul %44, %43, %cst_25 {dimension_numbers = #tpu.dot_dimension_numbers<[1], [1], [0], [0], [0, 0, 1, 0], [], []>} : vector<1x128xbf16>, vector<128x128xbf16>, vector<1x128xf32> -> vector<1x128xf32>
    %c0_26 = arith.constant 0 : index
    %c0_27 = arith.constant 0 : index
    %46 = vector.load %arg11[%c0_26, %c0_27] : memref<1x128xf32, #tpu.memory_space<vmem>>, vector<1x128xf32>
    tpu.vector_store %arg11[%c0_26, %c0_27], %45 {strides = array<i32>} : memref<1x128xf32, #tpu.memory_space<vmem>>, vector<1x128xf32>,
    return
  }
  func.func @transform_0(%arg0: i32) -> (i32, i32) {
    %c0_i32 = arith.constant 0 : i32
    %c0_i32_0 = arith.constant 0 : i32
    return %arg0, %c0_i32 : i32, i32
  }
  func.func @transform_1(%arg0: i32) -> (i32, i32) {
    %c0_i32 = arith.constant 0 : i32
    %c0_i32_0 = arith.constant 0 : i32
    return %arg0, %c0_i32 : i32, i32
  }
  func.func @transform_2(%arg0: i32) -> (i32, i32) {
    %c0_i32 = arith.constant 0 : i32
    %c0_i32_0 = arith.constant 0 : i32
    %c0_i32_1 = arith.constant 0 : i32
    return %c0_i32, %c0_i32_0 : i32, i32
  }
  func.func @transform_3(%arg0: i32) -> (i32, i32) {
    %c0_i32 = arith.constant 0 : i32
    %c0_i32_0 = arith.constant 0 : i32
    %c0_i32_1 = arith.constant 0 : i32
    return %c0_i32, %c0_i32_0 : i32, i32
  }
  func.func @transform_4(%arg0: i32) -> (i32, i32) {
    %c0_i32 = arith.constant 0 : i32
    %c0_i32_0 = arith.constant 0 : i32
    %c0_i32_1 = arith.constant 0 : i32
    return %c0_i32, %c0_i32_0 : i32, i32
  }
  func.func @transform_5(%arg0: i32) -> (i32, i32) {
    %c0_i32 = arith.constant 0 : i32
    %c0_i32_0 = arith.constant 0 : i32
    %c0_i32_1 = arith.constant 0 : i32
    return %c0_i32, %c0_i32_0 : i32, i32
  }
  func.func @transform_6(%arg0: i32) -> (i32, i32) {
    %c0_i32 = arith.constant 0 : i32
    %c0_i32_0 = arith.constant 0 : i32
    %c0_i32_1 = arith.constant 0 : i32
    return %c0_i32, %c0_i32_0 : i32, i32
  }
  func.func @transform_7(%arg0: i32) -> (i32, i32) {
    %c0_i32 = arith.constant 0 : i32
    %c0_i32_0 = arith.constant 0 : i32
    %c0_i32_1 = arith.constant 0 : i32
    return %c0_i32, %c0_i32_0 : i32, i32
  }
  func.func @transform_8(%arg0: i32) -> (i32, i32) {
    %c0_i32 = arith.constant 0 : i32
    %c0_i32_0 = arith.constant 0 : i32
    %c0_i32_1 = arith.constant 0 : i32
    return %c0_i32, %c0_i32_0 : i32, i32
  }
  func.func @transform_9(%arg0: i32) -> (i32, i32) {
    %c0_i32 = arith.constant 0 : i32
    %c0_i32_0 = arith.constant 0 : i32
    %c0_i32_1 = arith.constant 0 : i32
    return %c0_i32, %c0_i32_0 : i32, i32
  }
  func.func @transform_10(%arg0: i32) -> (i32, i32) {
    %c0_i32 = arith.constant 0 : i32
    %c0_i32_0 = arith.constant 0 : i32
    return %c0_i32, %arg0 : i32, i32
  }
}

</mosaic_0001>

<llo_original>
// kernel: tpu_custom_call.1
$region0: #{tpu_custom_call.1}
  #allocation0 [shape = 'u32[]', space=smem, size = 0x4, offset = 0x4, fixed_abs, tag = 'smem constant byte address 0x4 - core index']
  #allocation1 [shape = 'u32[144,128]{1,0:T(1,128)}', space=vmem, size = 0x12000, scoped, tag = 'internal scratch']
  %s0 = inlined_call_operand.hbm [shape: bf16[128,128], index: 0, kind: input, shape index: {}]
  %s1 = inlined_call_operand.hbm [shape: bf16[128,128], index: 1, kind: input, shape index: {}]
  %s2 = inlined_call_operand.hbm [shape: bf16[128,256], index: 2, kind: input, shape index: {}]
  %s3 = inlined_call_operand.vmem [shape: f32[1,256], index: 3, kind: input, shape index: {}]
  %s4 = inlined_call_operand.hbm [shape: bf16[128,128], index: 4, kind: input, shape index: {}]
  %s5 = inlined_call_operand.vmem [shape: f32[1,128], index: 5, kind: input, shape index: {}]
  %s6 = inlined_call_operand.hbm [shape: bf16[128,256], index: 6, kind: input, shape index: {}]
  %s7 = inlined_call_operand.vmem [shape: f32[1,256], index: 7, kind: input, shape index: {}]
  %s8 = inlined_call_operand.hbm [shape: bf16[128,128], index: 8, kind: input, shape index: {}]
  %s9 = inlined_call_operand.vmem [shape: f32[1,128], index: 9, kind: input, shape index: {}]
  %s10 = inlined_call_operand.hbm [shape: f32[1,128], index: 10, kind: output, shape index: {}]
  %s11 = sld [smem:[#allocation0]]
  $region74: #{tpu_custom_call.1} parent=0
    _
  %s13 = ssub.s32 1, %s11
  %s14 = scalar_select 0, %s13, %s11
  $region1: #{tpu_custom_call.1} parent=0
    #allocation2 [shape = 'u8[32768]{0}', space=vmem, size = 0x8000, scoped, tag = 'input window, operand 0, single buffered']
    #allocation3 [shape = 's32[1]{0}', space=sflag, size = 0x4, scoped, tag = 'scoped memory for tpu_custom_call.1']
    #allocation4 [shape = 's32[1]{0}', space=sflag, size = 0x4, scoped, tag = 'scoped memory for tpu_custom_call.1']
    #allocation5 [shape = 'u8[32768]{0}', space=vmem, size = 0x8000, scoped, tag = 'input window, operand 1, single buffered']
    #allocation6 [shape = 's32[1]{0}', space=sflag, size = 0x4, scoped, tag = 'scoped memory for tpu_custom_call.1']
    #allocation7 [shape = 'u8[65536]{0}', space=vmem, size = 0x10000, scoped, tag = 'input window, operand 2, single buffered']
    #allocation8 [shape = 'u8[32768]{0}', space=vmem, size = 0x8000, scoped, tag = 'input window, operand 4, single buffered']
    #allocation9 [shape = 's32[1]{0}', space=sflag, size = 0x4, scoped, tag = 'scoped memory for tpu_custom_call.1']
    #allocation10 [shape = 'u8[65536]{0}', space=vmem, size = 0x10000, scoped, tag = 'input window, operand 6, single buffered']
    #allocation11 [shape = 'u8[32768]{0}', space=vmem, size = 0x8000, scoped, tag = 'input window, operand 8, single buffered']
    #allocation12 [shape = 's32[1]{0}', space=sflag, size = 0x4, scoped, tag = 'scoped memory for tpu_custom_call.1']
    #allocation13 [shape = 'u8[512]{0}', space=vmem, size = 0x400, scoped, tag = 'output window, operand 0, single buffered']
    %15 = vsyncpa [#allocation3], 0
    %16 = vsyncpa [#allocation6], 0
    %17 = vsyncpa [#allocation9], 0
    %18 = vsyncpa [#allocation12], 0
    %19 = vsyncpa [#allocation4], 0
    // Predicated region
    $region2: #{tpu_custom_call.1} parent=1 // pred_check
      _
    $region3: #{tpu_custom_call.1} parent=1 // pred_check_branch
      %21 = sbr.rel (0) target = $region5
    $region4: #{tpu_custom_call.1} parent=1 // pred_region
      %s23 = ssub.s32 1024, 1024
      %24 = vsyncadd [#allocation3], %s23
      %s25 = sshll.u32 [#allocation2], 4
      %s26 = int_to_ptr.vmem [resolvable:$true] %s25
      %31 = dma.hbm_to_vmem [thread:$0]  %s0, 1024, %s26, [#allocation3], 64, 64, 4
    $region5: #{tpu_custom_call.1} parent=1 // pred_fallthru
      _
    // Predicated region
    $region6: #{tpu_custom_call.1} parent=1 // pred_check
      _
    $region7: #{tpu_custom_call.1} parent=1 // pred_check_branch
      %33 = sbr.rel (0) target = $region9
    $region8: #{tpu_custom_call.1} parent=1 // pred_region
      %s35 = ssub.s32 1024, 1024
      %36 = vsyncadd [#allocation6], %s35
      %s37 = sshll.u32 [#allocation5], 4
      %s38 = int_to_ptr.vmem [resolvable:$true] %s37
      %43 = dma.hbm_to_vmem [thread:$0]  %s1, 1024, %s38, [#allocation6], 64, 64, 4
    $region9: #{tpu_custom_call.1} parent=1 // pred_fallthru
      _
    // Predicated region
    $region10: #{tpu_custom_call.1} parent=1 // pred_check
      _
    $region11: #{tpu_custom_call.1} parent=1 // pred_check_branch
      %45 = sbr.rel (0) target = $region13
    $region12: #{tpu_custom_call.1} parent=1 // pred_region
      %s47 = ssub.s32 2048, 2048
      %48 = vsyncadd [#allocation6], %s47
      %s49 = sshll.u32 [#allocation7], 4
      %s50 = int_to_ptr.vmem [resolvable:$true] %s49
      %55 = dma.hbm_to_vmem [thread:$0]  %s2, 2048, %s50, [#allocation6], 128, 128, 8
    $region13: #{tpu_custom_call.1} parent=1 // pred_fallthru
      _
    // Predicated region
    $region14: #{tpu_custom_call.1} parent=1 // pred_check
      _
    $region15: #{tpu_custom_call.1} parent=1 // pred_check_branch
      %57 = sbr.rel (0) target = $region17
    $region16: #{tpu_custom_call.1} parent=1 // pred_region
      _
    $region17: #{tpu_custom_call.1} parent=1 // pred_fallthru
      _
    // Predicated region
    $region18: #{tpu_custom_call.1} parent=1 // pred_check
      _
    $region19: #{tpu_custom_call.1} parent=1 // pred_check_branch
      %59 = sbr.rel (0) target = $region21
    $region20: #{tpu_custom_call.1} parent=1 // pred_region
      %s61 = ssub.s32 1024, 1024
      %62 = vsyncadd [#allocation9], %s61
      %s63 = sshll.u32 [#allocation8], 4
      %s64 = int_to_ptr.vmem [resolvable:$true] %s63
      %69 = dma.hbm_to_vmem [thread:$0]  %s4, 1024, %s64, [#allocation9], 64, 64, 4
    $region21: #{tpu_custom_call.1} parent=1 // pred_fallthru
      _
    // Predicated region
    $region22: #{tpu_custom_call.1} parent=1 // pred_check
      _
    $region23: #{tpu_custom_call.1} parent=1 // pred_check_branch
      %71 = sbr.rel (0) target = $region25
    $region24: #{tpu_custom_call.1} parent=1 // pred_region
      _
    $region25: #{tpu_custom_call.1} parent=1 // pred_fallthru
      _
    // Predicated region
    $region26: #{tpu_custom_call.1} parent=1 // pred_check
      _
    $region27: #{tpu_custom_call.1} parent=1 // pred_check_branch
      %73 = sbr.rel (0) target = $region29
    $region28: #{tpu_custom_call.1} parent=1 // pred_region
      %s75 = ssub.s32 2048, 2048
      %76 = vsyncadd [#allocation9], %s75
      %s77 = sshll.u32 [#allocation10], 4
      %s78 = int_to_ptr.vmem [resolvable:$true] %s77
      %83 = dma.hbm_to_vmem [thread:$0]  %s6, 2048, %s78, [#allocation9], 128, 128, 8
    $region29: #{tpu_custom_call.1} parent=1 // pred_fallthru
      _
    // Predicated region
    $region30: #{tpu_custom_call.1} parent=1 // pred_check
      _
    $region31: #{tpu_custom_call.1} parent=1 // pred_check_branch
      %85 = sbr.rel (0) target = $region33
    $region32: #{tpu_custom_call.1} parent=1 // pred_region
      _
    $region33: #{tpu_custom_call.1} parent=1 // pred_fallthru
      _
    // Predicated region
    $region34: #{tpu_custom_call.1} parent=1 // pred_check
      _
    $region35: #{tpu_custom_call.1} parent=1 // pred_check_branch
      %87 = sbr.rel (0) target = $region37
    $region36: #{tpu_custom_call.1} parent=1 // pred_region
      %s89 = ssub.s32 1024, 1024
      %90 = vsyncadd [#allocation12], %s89
      %s91 = sshll.u32 [#allocation11], 4
      %s92 = int_to_ptr.vmem [resolvable:$true] %s91
      %97 = dma.hbm_to_vmem [thread:$0]  %s8, 1024, %s92, [#allocation12], 64, 64, 4
    $region37: #{tpu_custom_call.1} parent=1 // pred_fallthru
      _
    // Predicated region
    $region38: #{tpu_custom_call.1} parent=1 // pred_check
      _
    $region39: #{tpu_custom_call.1} parent=1 // pred_check_branch
      %99 = sbr.rel (0) target = $region41
    $region40: #{tpu_custom_call.1} parent=1 // pred_region
      _
    $region41: #{tpu_custom_call.1} parent=1 // pred_fallthru
      _
    // Predicated region
    $region42: #{tpu_custom_call.1} parent=1 // pred_check
      _
    $region43: #{tpu_custom_call.1} parent=1 // pred_check_branch
      %101 = sbr.rel (0) target = $region45
    $region44: #{tpu_custom_call.1} parent=1 // pred_region
      %102 = dma.done [#allocation3], 1024
    $region45: #{tpu_custom_call.1} parent=1 // pred_fallthru
      _
    // Predicated region
    $region46: #{tpu_custom_call.1} parent=1 // pred_check
      _
    $region47: #{tpu_custom_call.1} parent=1 // pred_check_branch
      %104 = sbr.rel (0) target = $region49
    $region48: #{tpu_custom_call.1} parent=1 // pred_region
      %105 = dma.done [#allocation6], 1024
    $region49: #{tpu_custom_call.1} parent=1 // pred_fallthru
      _
    // Predicated region
    $region50: #{tpu_custom_call.1} parent=1 // pred_check
      _
    $region51: #{tpu_custom_call.1} parent=1 // pred_check_branch
      %107 = sbr.rel (0) target = $region53
    $region52: #{tpu_custom_call.1} parent=1 // pred_region
      %108 = dma.done [#allocation6], 2048
    $region53: #{tpu_custom_call.1} parent=1 // pred_fallthru
      _
    // Predicated region
    $region54: #{tpu_custom_call.1} parent=1 // pred_check
      _
    $region55: #{tpu_custom_call.1} parent=1 // pred_check_branch
      %110 = sbr.rel (0) target = $region57
    $region56: #{tpu_custom_call.1} parent=1 // pred_region
      %111 = dma.done [#allocation9], 1024
    $region57: #{tpu_custom_call.1} parent=1 // pred_fallthru
      _
    // Predicated region
    $region58: #{tpu_custom_call.1} parent=1 // pred_check
      _
    $region59: #{tpu_custom_call.1} parent=1 // pred_check_branch
      %113 = sbr.rel (0) target = $region61
    $region60: #{tpu_custom_call.1} parent=1 // pred_region
      %114 = dma.done [#allocation9], 2048
    $region61: #{tpu_custom_call.1} parent=1 // pred_fallthru
      _
    // Predicated region
    $region62: #{tpu_custom_call.1} parent=1 // pred_check
      _
    $region63: #{tpu_custom_call.1} parent=1 // pred_check_branch
      %116 = sbr.rel (0) target = $region65
    $region64: #{tpu_custom_call.1} parent=1 // pred_region
      %117 = dma.done [#allocation12], 1024
    $region65: #{tpu_custom_call.1} parent=1 // pred_fallthru
      _
    %v120 = vld [vmem:[#allocation2] sm:$0xf]
    %v121 = vld [vmem:[#allocation2 + $0x4] sm:$0xf]
    %v122 = vld [vmem:[#allocation2 + $0x8] sm:$0xf]
    %v123 = vld [vmem:[#allocation2 + $0xc] sm:$0xf]
    %v124 = vld [vmem:[#allocation2 + $0x10] sm:$0xf]
    %v125 = vld [vmem:[#allocation2 + $0x14] sm:$0xf]
    %v126 = vld [vmem:[#allocation2 + $0x18] sm:$0xf]
    %v127 = vld [vmem:[#allocation2 + $0x1c] sm:$0xf]
    %v128 = vld [vmem:[#allocation2 + $0x20] sm:$0xf]
    %v129 = vld [vmem:[#allocation2 + $0x24] sm:$0xf]
    %v130 = vld [vmem:[#allocation2 + $0x28] sm:$0xf]
    %v131 = vld [vmem:[#allocation2 + $0x2c] sm:$0xf]
    %v132 = vld [vmem:[#allocation2 + $0x30] sm:$0xf]
    %v133 = vld [vmem:[#allocation2 + $0x34] sm:$0xf]
    %v134 = vld [vmem:[#allocation2 + $0x38] sm:$0xf]
    %v135 = vld [vmem:[#allocation2 + $0x3c] sm:$0xf]
    %v136 = vld [vmem:[#allocation7] sm:$0xff]
    %v137 = vld [vmem:[#allocation7 + $0x8] sm:$0xff]
    %v138 = vld [vmem:[#allocation7 + $0x10] sm:$0xff]
    %v139 = vld [vmem:[#allocation7 + $0x18] sm:$0xff]
    %v140 = vld [vmem:[#allocation7 + $0x20] sm:$0xff]
    %v141 = vld [vmem:[#allocation7 + $0x28] sm:$0xff]
    %v142 = vld [vmem:[#allocation7 + $0x30] sm:$0xff]
    %v143 = vld [vmem:[#allocation7 + $0x38] sm:$0xff]
    %v144 = vld [vmem:[#allocation7 + $0x40] sm:$0xff]
    %v145 = vld [vmem:[#allocation7 + $0x48] sm:$0xff]
    %v146 = vld [vmem:[#allocation7 + $0x50] sm:$0xff]
    %v147 = vld [vmem:[#allocation7 + $0x58] sm:$0xff]
    %v148 = vld [vmem:[#allocation7 + $0x60] sm:$0xff]
    %v149 = vld [vmem:[#allocation7 + $0x68] sm:$0xff]
    %v150 = vld [vmem:[#allocation7 + $0x70] sm:$0xff]
    %v151 = vld [vmem:[#allocation7 + $0x78] sm:$0xff]
    %v152 = vld [vmem:[%s3] sm:$0x3]
    %v154 = vlaneseq
    %v155 = vshrl.u32 %v154, 7
    %v156 = vsub.s32 0, %v155
    %v157 = vrot.slane %v152, %v156
    %v158 = vlaneseq
    %v159 = vshrl.u32 %v158, 7
    %v160 = vsub.s32 1, %v159
    %v161 = vrot.slane %v152, %v160
    %v180 = vunpack.c.l.b16 %v120
    %v181 = vunpack.c.l.b16 %v121
    %v182 = vunpack.c.l.b16 %v122
    %v183 = vunpack.c.l.b16 %v123
    %v184 = vunpack.c.l.b16 %v124
    %v185 = vunpack.c.l.b16 %v125
    %v186 = vunpack.c.l.b16 %v126
    %v187 = vunpack.c.l.b16 %v127
    %v188 = vunpack.c.l.b16 %v128
    %v189 = vunpack.c.l.b16 %v129
    %v190 = vunpack.c.l.b16 %v130
    %v191 = vunpack.c.l.b16 %v131
    %v192 = vunpack.c.l.b16 %v132
    %v193 = vunpack.c.l.b16 %v133
    %v194 = vunpack.c.l.b16 %v134
    %v195 = vunpack.c.l.b16 %v135
    %v196 = vpack.c.b16 %v181, %v180
    %v197 = vpack.c.b16 %v183, %v182
    %v198 = vpack.c.b16 %v185, %v184
    %v199 = vpack.c.b16 %v187, %v186
    %v200 = vpack.c.b16 %v189, %v188
    %v201 = vpack.c.b16 %v191, %v190
    %v202 = vpack.c.b16 %v193, %v192
    %v203 = vpack.c.b16 %v195, %v194
    %v228 = vunpack.c.l.b16 %v136
    %v229 = vunpack.c.h.b16 %v136
    %v230 = vunpack.c.l.b16 %v137
    %v231 = vunpack.c.h.b16 %v137
    %v232 = vunpack.c.l.b16 %v138
    %v233 = vunpack.c.h.b16 %v138
    %v234 = vunpack.c.l.b16 %v139
    %v235 = vunpack.c.h.b16 %v139
    %v236 = vunpack.c.l.b16 %v140
    %v237 = vunpack.c.h.b16 %v140
    %v238 = vunpack.c.l.b16 %v141
    %v239 = vunpack.c.h.b16 %v141
    %v240 = vunpack.c.l.b16 %v142
    %v241 = vunpack.c.h.b16 %v142
    %v242 = vunpack.c.l.b16 %v143
    %v243 = vunpack.c.h.b16 %v143
    %v244 = vunpack.c.l.b16 %v144
    %v245 = vunpack.c.h.b16 %v144
    %v246 = vunpack.c.l.b16 %v145
    %v247 = vunpack.c.h.b16 %v145
    %v248 = vunpack.c.l.b16 %v146
    %v249 = vunpack.c.h.b16 %v146
    %v250 = vunpack.c.l.b16 %v147
    %v251 = vunpack.c.h.b16 %v147
    %v252 = vunpack.c.l.b16 %v148
    %v253 = vunpack.c.h.b16 %v148
    %v254 = vunpack.c.l.b16 %v149
    %v255 = vunpack.c.h.b16 %v149
    %v256 = vunpack.c.l.b16 %v150
    %v257 = vunpack.c.h.b16 %v150
    %v258 = vunpack.c.l.b16 %v151
    %v259 = vunpack.c.h.b16 %v151
    %v260 = vpack.c.b16 %v230, %v228
    %v261 = vpack.c.b16 %v231, %v229
    %v262 = vpack.c.b16 %v234, %v232
    %v263 = vpack.c.b16 %v235, %v233
    %v264 = vpack.c.b16 %v238, %v236
    %v265 = vpack.c.b16 %v239, %v237
    %v266 = vpack.c.b16 %v242, %v240
    %v267 = vpack.c.b16 %v243, %v241
    %v268 = vpack.c.b16 %v246, %v244
    %v269 = vpack.c.b16 %v247, %v245
    %v270 = vpack.c.b16 %v250, %v248
    %v271 = vpack.c.b16 %v251, %v249
    %v272 = vpack.c.b16 %v254, %v252
    %v273 = vpack.c.b16 %v255, %v253
    %v274 = vpack.c.b16 %v258, %v256
    %v275 = vpack.c.b16 %v259, %v257
    %292 = vmatprep.subr.bf16.mxu0 %v261
    %293 = vmatpush1.bf16.msra.mxu0 %v260
    %294 = vmatprep.subr.bf16.mxu0 %v263
    %295 = vmatpush1.bf16.msra.mxu0 %v262
    %296 = vmatprep.subr.bf16.mxu0 %v265
    %297 = vmatpush1.bf16.msra.mxu0 %v264
    %298 = vmatprep.subr.bf16.mxu0 %v267
    %299 = vmatpush1.bf16.msra.mxu0 %v266
    %300 = vmatprep.subr.bf16.mxu0 %v269
    %301 = vmatpush1.bf16.msra.mxu0 %v268
    %302 = vmatprep.subr.bf16.mxu0 %v271
    %303 = vmatpush1.bf16.msra.mxu0 %v270
    %304 = vmatprep.subr.bf16.mxu0 %v273
    %305 = vmatpush1.bf16.msra.mxu0 %v272
    %306 = vmatprep.subr.bf16.mxu0 %v275
    %307 = vmatpush1.bf16.msra.mxu0 %v274
    %308 = vmatprep.subr.bf16.mxu0 0
    %309 = vmatpush1.bf16.msra.mxu0 0
    %310 = vmatprep.subr.bf16.mxu0 0
    %311 = vmatpush1.bf16.msra.mxu0 0
    %312 = vmatprep.subr.bf16.mxu0 0
    %313 = vmatpush1.bf16.msra.mxu0 0
    %314 = vmatprep.subr.bf16.mxu0 0
    %315 = vmatpush1.bf16.msra.mxu0 0
    %316 = vmatprep.subr.bf16.mxu0 0
    %317 = vmatpush1.bf16.msra.mxu0 0
    %318 = vmatprep.subr.bf16.mxu0 0
    %319 = vmatpush1.bf16.msra.mxu0 0
    %320 = vmatprep.subr.bf16.mxu0 0
    %321 = vmatpush1.bf16.msra.mxu0 0
    %322 = vmatprep.subr.bf16.mxu0 0
    %323 = vmatpush1.bf16.msra.mxu0 0
    %324 = vmatprep.mubr.bf16.mxu0 0
    %325 = vmatmul.mubr.bf16.gmra.mrb[0].mxu0 %v196
    %v326 = vpop.f32.mrb[0].mxu0
    %v327 = vadd.f32 %v157, %v326
    %v328 = vpop.f32.mrb[0].mxu0
    %v329 = vadd.f32 %v161, %v328
    %v330 = vpop.f32.mrb[0].mxu0
    %v331 = vadd.f32 %v157, %v330
    %v332 = vpop.f32.mrb[0].mxu0
    %v333 = vadd.f32 %v161, %v332
    %334 = vmatprep.mubr.bf16.mxu0 0
    %335 = vmatmul.mubr.bf16.gmra.mrb[0].mxu0 %v197
    %v336 = vpop.f32.mrb[0].mxu0
    %v337 = vadd.f32 %v157, %v336
    %v338 = vpop.f32.mrb[0].mxu0
    %v339 = vadd.f32 %v161, %v338
    %v340 = vpop.f32.mrb[0].mxu0
    %v341 = vadd.f32 %v157, %v340
    %v342 = vpop.f32.mrb[0].mxu0
    %v343 = vadd.f32 %v161, %v342
    %344 = vmatprep.mubr.bf16.mxu0 0
    %345 = vmatmul.mubr.bf16.gmra.mrb[0].mxu0 %v198
    %v346 = vpop.f32.mrb[0].mxu0
    %v347 = vadd.f32 %v157, %v346
    %v348 = vpop.f32.mrb[0].mxu0
    %v349 = vadd.f32 %v161, %v348
    %v350 = vpop.f32.mrb[0].mxu0
    %v351 = vadd.f32 %v157, %v350
    %v352 = vpop.f32.mrb[0].mxu0
    %v353 = vadd.f32 %v161, %v352
    %354 = vmatprep.mubr.bf16.mxu0 0
    %355 = vmatmul.mubr.bf16.gmra.mrb[0].mxu0 %v199
    %v356 = vpop.f32.mrb[0].mxu0
    %v357 = vadd.f32 %v157, %v356
    %v358 = vpop.f32.mrb[0].mxu0
    %v359 = vadd.f32 %v161, %v358
    %v360 = vpop.f32.mrb[0].mxu0
    %v361 = vadd.f32 %v157, %v360
    %v362 = vpop.f32.mrb[0].mxu0
    %v363 = vadd.f32 %v161, %v362
    %364 = vmatprep.mubr.bf16.mxu0 0
    %365 = vmatmul.mubr.bf16.gmra.mrb[0].mxu0 %v200
    %v366 = vpop.f32.mrb[0].mxu0
    %v367 = vadd.f32 %v157, %v366
    %v368 = vpop.f32.mrb[0].mxu0
    %v369 = vadd.f32 %v161, %v368
    %v370 = vpop.f32.mrb[0].mxu0
    %v371 = vadd.f32 %v157, %v370
    %v372 = vpop.f32.mrb[0].mxu0
    %v373 = vadd.f32 %v161, %v372
    %374 = vmatprep.mubr.bf16.mxu0 0
    %375 = vmatmul.mubr.bf16.gmra.mrb[0].mxu0 %v201
    %v376 = vpop.f32.mrb[0].mxu0
    %v377 = vadd.f32 %v157, %v376
    %v378 = vpop.f32.mrb[0].mxu0
    %v379 = vadd.f32 %v161, %v378
    %v380 = vpop.f32.mrb[0].mxu0
    %v381 = vadd.f32 %v157, %v380
    %v382 = vpop.f32.mrb[0].mxu0
    %v383 = vadd.f32 %v161, %v382
    %384 = vmatprep.mubr.bf16.mxu0 0
    %385 = vmatmul.mubr.bf16.gmra.mrb[0].mxu0 %v202
    %v386 = vpop.f32.mrb[0].mxu0
    %v387 = vadd.f32 %v157, %v386
    %v388 = vpop.f32.mrb[0].mxu0
    %v389 = vadd.f32 %v161, %v388
    %v390 = vpop.f32.mrb[0].mxu0
    %v391 = vadd.f32 %v157, %v390
    %v392 = vpop.f32.mrb[0].mxu0
    %v393 = vadd.f32 %v161, %v392
    %394 = vmatprep.mubr.bf16.mxu0 0
    %395 = vmatmul.mubr.bf16.gmra.mrb[0].mxu0 %v203
    %v396 = vpop.f32.mrb[0].mxu0
    %v397 = vadd.f32 %v157, %v396
    %v398 = vpop.f32.mrb[0].mxu0
    %v399 = vadd.f32 %v161, %v398
    %v400 = vpop.f32.mrb[0].mxu0
    %v401 = vadd.f32 %v157, %v400
    %v402 = vpop.f32.mrb[0].mxu0
    %v403 = vadd.f32 %v161, %v402
    %404 = vdwg.mxu0
    %v405 = vxor.u32 %v327, 2147483648
    %v406 = vxor.u32 %v331, 2147483648
    %v407 = vxor.u32 %v337, 2147483648
    %v408 = vxor.u32 %v341, 2147483648
    %v409 = vxor.u32 %v347, 2147483648
    %v410 = vxor.u32 %v351, 2147483648
    %v411 = vxor.u32 %v357, 2147483648
    %v412 = vxor.u32 %v361, 2147483648
    %v413 = vxor.u32 %v367, 2147483648
    %v414 = vxor.u32 %v371, 2147483648
    %v415 = vxor.u32 %v377, 2147483648
    %v416 = vxor.u32 %v381, 2147483648
    %v417 = vxor.u32 %v387, 2147483648
    %v418 = vxor.u32 %v391, 2147483648
    %v419 = vxor.u32 %v397, 2147483648
    %v420 = vxor.u32 %v401, 2147483648
    %v421 = vmul.f32 %v405, 1.442695
    %v422 = vpow.pop %v421
    %v423 = vmul.f32 %v406, 1.442695
    %v424 = vpow.pop %v423
    %v425 = vmul.f32 %v407, 1.442695
    %v426 = vpow.pop %v425
    %v427 = vmul.f32 %v408, 1.442695
    %v428 = vpow.pop %v427
    %v429 = vmul.f32 %v409, 1.442695
    %v430 = vpow.pop %v429
    %v431 = vmul.f32 %v410, 1.442695
    %v432 = vpow.pop %v431
    %v433 = vmul.f32 %v411, 1.442695
    %v434 = vpow.pop %v433
    %v435 = vmul.f32 %v412, 1.442695
    %v436 = vpow.pop %v435
    %v437 = vmul.f32 %v413, 1.442695
    %v438 = vpow.pop %v437
    %v439 = vmul.f32 %v414, 1.442695
    %v440 = vpow.pop %v439
    %v441 = vmul.f32 %v415, 1.442695
    %v442 = vpow.pop %v441
    %v443 = vmul.f32 %v416, 1.442695
    %v444 = vpow.pop %v443
    %v445 = vmul.f32 %v417, 1.442695
    %v446 = vpow.pop %v445
    %v447 = vmul.f32 %v418, 1.442695
    %v448 = vpow.pop %v447
    %v449 = vmul.f32 %v419, 1.442695
    %v450 = vpow.pop %v449
    %v451 = vmul.f32 %v420, 1.442695
    %v452 = vpow.pop %v451
    %v453 = vadd.f32 %v422, 1.0
    %v454 = vadd.f32 %v424, 1.0
    %v455 = vadd.f32 %v426, 1.0
    %v456 = vadd.f32 %v428, 1.0
    %v457 = vadd.f32 %v430, 1.0
    %v458 = vadd.f32 %v432, 1.0
    %v459 = vadd.f32 %v434, 1.0
    %v460 = vadd.f32 %v436, 1.0
    %v461 = vadd.f32 %v438, 1.0
    %v462 = vadd.f32 %v440, 1.0
    %v463 = vadd.f32 %v442, 1.0
    %v464 = vadd.f32 %v444, 1.0
    %v465 = vadd.f32 %v446, 1.0
    %v466 = vadd.f32 %v448, 1.0
    %v467 = vadd.f32 %v450, 1.0
    %v468 = vadd.f32 %v452, 1.0
    %v469 = vrcp.pop %v453
    %v470 = vmul.f32 1.0, %v469
    %v471 = vrcp.pop %v454
    %v472 = vmul.f32 1.0, %v471
    %v473 = vrcp.pop %v455
    %v474 = vmul.f32 1.0, %v473
    %v475 = vrcp.pop %v456
    %v476 = vmul.f32 1.0, %v475
    %v477 = vrcp.pop %v457
    %v478 = vmul.f32 1.0, %v477
    %v479 = vrcp.pop %v458
    %v480 = vmul.f32 1.0, %v479
    %v481 = vrcp.pop %v459
    %v482 = vmul.f32 1.0, %v481
    %v483 = vrcp.pop %v460
    %v484 = vmul.f32 1.0, %v483
    %v485 = vrcp.pop %v461
    %v486 = vmul.f32 1.0, %v485
    %v487 = vrcp.pop %v462
    %v488 = vmul.f32 1.0, %v487
    %v489 = vrcp.pop %v463
    %v490 = vmul.f32 1.0, %v489
    %v491 = vrcp.pop %v464
    %v492 = vmul.f32 1.0, %v491
    %v493 = vrcp.pop %v465
    %v494 = vmul.f32 1.0, %v493
    %v495 = vrcp.pop %v466
    %v496 = vmul.f32 1.0, %v495
    %v497 = vrcp.pop %v467
    %v498 = vmul.f32 1.0, %v497
    %v499 = vrcp.pop %v468
    %v500 = vmul.f32 1.0, %v499
    %v501 = vmul.f32 %v327, %v470
    %v502 = vmul.f32 %v331, %v472
    %v503 = vmul.f32 %v337, %v474
    %v504 = vmul.f32 %v341, %v476
    %v505 = vmul.f32 %v347, %v478
    %v506 = vmul.f32 %v351, %v480
    %v507 = vmul.f32 %v357, %v482
    %v508 = vmul.f32 %v361, %v484
    %v509 = vmul.f32 %v367, %v486
    %v510 = vmul.f32 %v371, %v488
    %v511 = vmul.f32 %v377, %v490
    %v512 = vmul.f32 %v381, %v492
    %v513 = vmul.f32 %v387, %v494
    %v514 = vmul.f32 %v391, %v496
    %v515 = vmul.f32 %v397, %v498
    %v516 = vmul.f32 %v401, %v500
    %v517 = vmul.f32 %v501, %v329
    %v518 = vmul.f32 %v502, %v333
    %v519 = vmul.f32 %v503, %v339
    %v520 = vmul.f32 %v504, %v343
    %v521 = vmul.f32 %v505, %v349
    %v522 = vmul.f32 %v506, %v353
    %v523 = vmul.f32 %v507, %v359
    %v524 = vmul.f32 %v508, %v363
    %v525 = vmul.f32 %v509, %v369
    %v526 = vmul.f32 %v510, %v373
    %v527 = vmul.f32 %v511, %v379
    %v528 = vmul.f32 %v512, %v383
    %v529 = vmul.f32 %v513, %v389
    %v530 = vmul.f32 %v514, %v393
    %v531 = vmul.f32 %v515, %v399
    %v532 = vmul.f32 %v516, %v403
    %v533 = vpack.c.bf16 %v518, %v517
    %v534 = vpack.c.bf16 %v520, %v519
    %v535 = vpack.c.bf16 %v522, %v521
    %v536 = vpack.c.bf16 %v524, %v523
    %v537 = vpack.c.bf16 %v526, %v525
    %v538 = vpack.c.bf16 %v528, %v527
    %v539 = vpack.c.bf16 %v530, %v529
    %v540 = vpack.c.bf16 %v532, %v531
    %v541 = vld [vmem:[#allocation8] sm:$0xf]
    %v542 = vld [vmem:[#allocation8 + $0x4] sm:$0xf]
    %v543 = vld [vmem:[#allocation8 + $0x8] sm:$0xf]
    %v544 = vld [vmem:[#allocation8 + $0xc] sm:$0xf]
    %v545 = vld [vmem:[#allocation8 + $0x10] sm:$0xf]
    %v546 = vld [vmem:[#allocation8 + $0x14] sm:$0xf]
    %v547 = vld [vmem:[#allocation8 + $0x18] sm:$0xf]
    %v548 = vld [vmem:[#allocation8 + $0x1c] sm:$0xf]
    %v549 = vld [vmem:[#allocation8 + $0x20] sm:$0xf]
    %v550 = vld [vmem:[#allocation8 + $0x24] sm:$0xf]
    %v551 = vld [vmem:[#allocation8 + $0x28] sm:$0xf]
    %v552 = vld [vmem:[#allocation8 + $0x2c] sm:$0xf]
    %v553 = vld [vmem:[#allocation8 + $0x30] sm:$0xf]
    %v554 = vld [vmem:[#allocation8 + $0x34] sm:$0xf]
    %v555 = vld [vmem:[#allocation8 + $0x38] sm:$0xf]
    %v556 = vld [vmem:[#allocation8 + $0x3c] sm:$0xf]
    %v557 = vld [vmem:[%s5] sm:$0x1]
    %v559 = vlaneseq
    %v560 = vshrl.u32 %v559, 7
    %v561 = vsub.s32 0, %v560
    %v562 = vrot.slane %v557, %v561
    %v580 = vunpack.c.l.b16 %v541
    %v581 = vunpack.c.l.b16 %v542
    %v582 = vunpack.c.l.b16 %v543
    %v583 = vunpack.c.l.b16 %v544
    %v584 = vunpack.c.l.b16 %v545
    %v585 = vunpack.c.l.b16 %v546
    %v586 = vunpack.c.l.b16 %v547
    %v587 = vunpack.c.l.b16 %v548
    %v588 = vunpack.c.l.b16 %v549
    %v589 = vunpack.c.l.b16 %v550
    %v590 = vunpack.c.l.b16 %v551
    %v591 = vunpack.c.l.b16 %v552
    %v592 = vunpack.c.l.b16 %v553
    %v593 = vunpack.c.l.b16 %v554
    %v594 = vunpack.c.l.b16 %v555
    %v595 = vunpack.c.l.b16 %v556
    %v596 = vpack.c.b16 %v581, %v580
    %v597 = vpack.c.b16 %v583, %v582
    %v598 = vpack.c.b16 %v585, %v584
    %v599 = vpack.c.b16 %v587, %v586
    %v600 = vpack.c.b16 %v589, %v588
    %v601 = vpack.c.b16 %v591, %v590
    %v602 = vpack.c.b16 %v593, %v592
    %v603 = vpack.c.b16 %v595, %v594
    %612 = vmatprep.subr.bf16.mxu0 0
    %613 = vmatpush1.bf16.msra.mxu0 %v596
    %614 = vmatprep.subr.bf16.mxu0 0
    %615 = vmatpush1.bf16.msra.mxu0 %v597
    %616 = vmatprep.subr.bf16.mxu0 0
    %617 = vmatpush1.bf16.msra.mxu0 %v598
    %618 = vmatprep.subr.bf16.mxu0 0
    %619 = vmatpush1.bf16.msra.mxu0 %v599
    %620 = vmatprep.subr.bf16.mxu0 0
    %621 = vmatpush1.bf16.msra.mxu0 %v600
    %622 = vmatprep.subr.bf16.mxu0 0
    %623 = vmatpush1.bf16.msra.mxu0 %v601
    %624 = vmatprep.subr.bf16.mxu0 0
    %625 = vmatpush1.bf16.msra.mxu0 %v602
    %626 = vmatprep.subr.bf16.mxu0 0
    %627 = vmatpush1.bf16.msra.mxu0 %v603
    %628 = vmatprep.subr.bf16.mxu0 0
    %629 = vmatpush1.bf16.msra.mxu0 0
    %630 = vmatprep.subr.bf16.mxu0 0
    %631 = vmatpush1.bf16.msra.mxu0 0
    %632 = vmatprep.subr.bf16.mxu0 0
    %633 = vmatpush1.bf16.msra.mxu0 0
    %634 = vmatprep.subr.bf16.mxu0 0
    %635 = vmatpush1.bf16.msra.mxu0 0
    %636 = vmatprep.subr.bf16.mxu0 0
    %637 = vmatpush1.bf16.msra.mxu0 0
    %638 = vmatprep.subr.bf16.mxu0 0
    %639 = vmatpush1.bf16.msra.mxu0 0
    %640 = vmatprep.subr.bf16.mxu0 0
    %641 = vmatpush1.bf16.msra.mxu0 0
    %642 = vmatprep.subr.bf16.mxu0 0
    %643 = vmatpush1.bf16.msra.mxu0 0
    %644 = vmatprep.mubr.bf16.mxu0 0
    %645 = vmatmul.mubr.bf16.gmra.mrb[0].mxu0 %v533
    %v646 = vpop.f32.mrb[0].mxu0
    %v647 = vadd.f32 %v562, %v646
    %v648 = vpop.f32.mrb[0].mxu0
    %v649 = vpop.f32.mrb[0].mxu0
    %v650 = vadd.f32 %v562, %v649
    %v651 = vpop.f32.mrb[0].mxu0
    %652 = vmatprep.mubr.bf16.mxu0 0
    %653 = vmatmul.mubr.bf16.gmra.mrb[0].mxu0 %v534
    %v654 = vpop.f32.mrb[0].mxu0
    %v655 = vadd.f32 %v562, %v654
    %v656 = vpop.f32.mrb[0].mxu0
    %v657 = vpop.f32.mrb[0].mxu0
    %v658 = vadd.f32 %v562, %v657
    %v659 = vpop.f32.mrb[0].mxu0
    %660 = vmatprep.mubr.bf16.mxu0 0
    %661 = vmatmul.mubr.bf16.gmra.mrb[0].mxu0 %v535
    %v662 = vpop.f32.mrb[0].mxu0
    %v663 = vadd.f32 %v562, %v662
    %v664 = vpop.f32.mrb[0].mxu0
    %v665 = vpop.f32.mrb[0].mxu0
    %v666 = vadd.f32 %v562, %v665
    %v667 = vpop.f32.mrb[0].mxu0
    %668 = vmatprep.mubr.bf16.mxu0 0
    %669 = vmatmul.mubr.bf16.gmra.mrb[0].mxu0 %v536
    %v670 = vpop.f32.mrb[0].mxu0
    %v671 = vadd.f32 %v562, %v670
    %v672 = vpop.f32.mrb[0].mxu0
    %v673 = vpop.f32.mrb[0].mxu0
    %v674 = vadd.f32 %v562, %v673
    %v675 = vpop.f32.mrb[0].mxu0
    %676 = vmatprep.mubr.bf16.mxu0 0
    %677 = vmatmul.mubr.bf16.gmra.mrb[0].mxu0 %v537
    %v678 = vpop.f32.mrb[0].mxu0
    %v679 = vadd.f32 %v562, %v678
    %v680 = vpop.f32.mrb[0].mxu0
    %v681 = vpop.f32.mrb[0].mxu0
    %v682 = vadd.f32 %v562, %v681
    %v683 = vpop.f32.mrb[0].mxu0
    %684 = vmatprep.mubr.bf16.mxu0 0
    %685 = vmatmul.mubr.bf16.gmra.mrb[0].mxu0 %v538
    %v686 = vpop.f32.mrb[0].mxu0
    %v687 = vadd.f32 %v562, %v686
    %v688 = vpop.f32.mrb[0].mxu0
    %v689 = vpop.f32.mrb[0].mxu0
    %v690 = vadd.f32 %v562, %v689
    %v691 = vpop.f32.mrb[0].mxu0
    %692 = vmatprep.mubr.bf16.mxu0 0
    %693 = vmatmul.mubr.bf16.gmra.mrb[0].mxu0 %v539
    %v694 = vpop.f32.mrb[0].mxu0
    %v695 = vadd.f32 %v562, %v694
    %v696 = vpop.f32.mrb[0].mxu0
    %v697 = vpop.f32.mrb[0].mxu0
    %v698 = vadd.f32 %v562, %v697
    %v699 = vpop.f32.mrb[0].mxu0
    %700 = vmatprep.mubr.bf16.mxu0 0
    %701 = vmatmul.mubr.bf16.gmra.mrb[0].mxu0 %v540
    %v702 = vpop.f32.mrb[0].mxu0
    %v703 = vadd.f32 %v562, %v702
    %v704 = vpop.f32.mrb[0].mxu0
    %v705 = vpop.f32.mrb[0].mxu0
    %v706 = vadd.f32 %v562, %v705
    %v707 = vpop.f32.mrb[0].mxu0
    %708 = vdwg.mxu0
    %v709 = vld [vmem:[#allocation5] sm:$0xf]
    %v710 = vld [vmem:[#allocation5 + $0x4] sm:$0xf]
    %v711 = vld [vmem:[#allocation5 + $0x8] sm:$0xf]
    %v712 = vld [vmem:[#allocation5 + $0xc] sm:$0xf]
    %v713 = vld [vmem:[#allocation5 + $0x10] sm:$0xf]
    %v714 = vld [vmem:[#allocation5 + $0x14] sm:$0xf]
    %v715 = vld [vmem:[#allocation5 + $0x18] sm:$0xf]
    %v716 = vld [vmem:[#allocation5 + $0x1c] sm:$0xf]
    %v717 = vld [vmem:[#allocation5 + $0x20] sm:$0xf]
    %v718 = vld [vmem:[#allocation5 + $0x24] sm:$0xf]
    %v719 = vld [vmem:[#allocation5 + $0x28] sm:$0xf]
    %v720 = vld [vmem:[#allocation5 + $0x2c] sm:$0xf]
    %v721 = vld [vmem:[#allocation5 + $0x30] sm:$0xf]
    %v722 = vld [vmem:[#allocation5 + $0x34] sm:$0xf]
    %v723 = vld [vmem:[#allocation5 + $0x38] sm:$0xf]
    %v724 = vld [vmem:[#allocation5 + $0x3c] sm:$0xf]
    %v725 = vld [vmem:[#allocation10] sm:$0xff]
    %v726 = vld [vmem:[#allocation10 + $0x8] sm:$0xff]
    %v727 = vld [vmem:[#allocation10 + $0x10] sm:$0xff]
    %v728 = vld [vmem:[#allocation10 + $0x18] sm:$0xff]
    %v729 = vld [vmem:[#allocation10 + $0x20] sm:$0xff]
    %v730 = vld [vmem:[#allocation10 + $0x28] sm:$0xff]
    %v731 = vld [vmem:[#allocation10 + $0x30] sm:$0xff]
    %v732 = vld [vmem:[#allocation10 + $0x38] sm:$0xff]
    %v733 = vld [vmem:[#allocation10 + $0x40] sm:$0xff]
    %v734 = vld [vmem:[#allocation10 + $0x48] sm:$0xff]
    %v735 = vld [vmem:[#allocation10 + $0x50] sm:$0xff]
    %v736 = vld [vmem:[#allocation10 + $0x58] sm:$0xff]
    %v737 = vld [vmem:[#allocation10 + $0x60] sm:$0xff]
    %v738 = vld [vmem:[#allocation10 + $0x68] sm:$0xff]
    %v739 = vld [vmem:[#allocation10 + $0x70] sm:$0xff]
    %v740 = vld [vmem:[#allocation10 + $0x78] sm:$0xff]
    %v741 = vld [vmem:[%s7] sm:$0x3]
    %v743 = vlaneseq
    %v744 = vshrl.u32 %v743, 7
    %v745 = vsub.s32 0, %v744
    %v746 = vrot.slane %v741, %v745
    %v747 = vlaneseq
    %v748 = vshrl.u32 %v747, 7
    %v749 = vsub.s32 1, %v748
    %v750 = vrot.slane %v741, %v749
    %v769 = vunpack.c.l.b16 %v709
    %v770 = vunpack.c.l.b16 %v710
    %v771 = vunpack.c.l.b16 %v711
    %v772 = vunpack.c.l.b16 %v712
    %v773 = vunpack.c.l.b16 %v713
    %v774 = vunpack.c.l.b16 %v714
    %v775 = vunpack.c.l.b16 %v715
    %v776 = vunpack.c.l.b16 %v716
    %v777 = vunpack.c.l.b16 %v717
    %v778 = vunpack.c.l.b16 %v718
    %v779 = vunpack.c.l.b16 %v719
    %v780 = vunpack.c.l.b16 %v720
    %v781 = vunpack.c.l.b16 %v721
    %v782 = vunpack.c.l.b16 %v722
    %v783 = vunpack.c.l.b16 %v723
    %v784 = vunpack.c.l.b16 %v724
    %v785 = vpack.c.b16 %v770, %v769
    %v786 = vpack.c.b16 %v772, %v771
    %v787 = vpack.c.b16 %v774, %v773
    %v788 = vpack.c.b16 %v776, %v775
    %v789 = vpack.c.b16 %v778, %v777
    %v790 = vpack.c.b16 %v780, %v779
    %v791 = vpack.c.b16 %v782, %v781
    %v792 = vpack.c.b16 %v784, %v783
    %v817 = vunpack.c.l.b16 %v725
    %v818 = vunpack.c.h.b16 %v725
    %v819 = vunpack.c.l.b16 %v726
    %v820 = vunpack.c.h.b16 %v726
    %v821 = vunpack.c.l.b16 %v727
    %v822 = vunpack.c.h.b16 %v727
    %v823 = vunpack.c.l.b16 %v728
    %v824 = vunpack.c.h.b16 %v728
    %v825 = vunpack.c.l.b16 %v729
    %v826 = vunpack.c.h.b16 %v729
    %v827 = vunpack.c.l.b16 %v730
    %v828 = vunpack.c.h.b16 %v730
    %v829 = vunpack.c.l.b16 %v731
    %v830 = vunpack.c.h.b16 %v731
    %v831 = vunpack.c.l.b16 %v732
    %v832 = vunpack.c.h.b16 %v732
    %v833 = vunpack.c.l.b16 %v733
    %v834 = vunpack.c.h.b16 %v733
    %v835 = vunpack.c.l.b16 %v734
    %v836 = vunpack.c.h.b16 %v734
    %v837 = vunpack.c.l.b16 %v735
    %v838 = vunpack.c.h.b16 %v735
    %v839 = vunpack.c.l.b16 %v736
    %v840 = vunpack.c.h.b16 %v736
    %v841 = vunpack.c.l.b16 %v737
    %v842 = vunpack.c.h.b16 %v737
    %v843 = vunpack.c.l.b16 %v738
    %v844 = vunpack.c.h.b16 %v738
    %v845 = vunpack.c.l.b16 %v739
    %v846 = vunpack.c.h.b16 %v739
    %v847 = vunpack.c.l.b16 %v740
    %v848 = vunpack.c.h.b16 %v740
    %v849 = vpack.c.b16 %v819, %v817
    %v850 = vpack.c.b16 %v820, %v818
    %v851 = vpack.c.b16 %v823, %v821
    %v852 = vpack.c.b16 %v824, %v822
    %v853 = vpack.c.b16 %v827, %v825
    %v854 = vpack.c.b16 %v828, %v826
    %v855 = vpack.c.b16 %v831, %v829
    %v856 = vpack.c.b16 %v832, %v830
    %v857 = vpack.c.b16 %v835, %v833
    %v858 = vpack.c.b16 %v836, %v834
    %v859 = vpack.c.b16 %v839, %v837
    %v860 = vpack.c.b16 %v840, %v838
    %v861 = vpack.c.b16 %v843, %v841
    %v862 = vpack.c.b16 %v844, %v842
    %v863 = vpack.c.b16 %v847, %v845
    %v864 = vpack.c.b16 %v848, %v846
    %881 = vmatprep.subr.bf16.mxu0 %v850
    %882 = vmatpush1.bf16.msra.mxu0 %v849
    %883 = vmatprep.subr.bf16.mxu0 %v852
    %884 = vmatpush1.bf16.msra.mxu0 %v851
    %885 = vmatprep.subr.bf16.mxu0 %v854
    %886 = vmatpush1.bf16.msra.mxu0 %v853
    %887 = vmatprep.subr.bf16.mxu0 %v856
    %888 = vmatpush1.bf16.msra.mxu0 %v855
    %889 = vmatprep.subr.bf16.mxu0 %v858
    %890 = vmatpush1.bf16.msra.mxu0 %v857
    %891 = vmatprep.subr.bf16.mxu0 %v860
    %892 = vmatpush1.bf16.msra.mxu0 %v859
    %893 = vmatprep.subr.bf16.mxu0 %v862
    %894 = vmatpush1.bf16.msra.mxu0 %v861
    %895 = vmatprep.subr.bf16.mxu0 %v864
    %896 = vmatpush1.bf16.msra.mxu0 %v863
    %897 = vmatprep.subr.bf16.mxu0 0
    %898 = vmatpush1.bf16.msra.mxu0 0
    %899 = vmatprep.subr.bf16.mxu0 0
    %900 = vmatpush1.bf16.msra.mxu0 0
    %901 = vmatprep.subr.bf16.mxu0 0
    %902 = vmatpush1.bf16.msra.mxu0 0
    %903 = vmatprep.subr.bf16.mxu0 0
    %904 = vmatpush1.bf16.msra.mxu0 0
    %905 = vmatprep.subr.bf16.mxu0 0
    %906 = vmatpush1.bf16.msra.mxu0 0
    %907 = vmatprep.subr.bf16.mxu0 0
    %908 = vmatpush1.bf16.msra.mxu0 0
    %909 = vmatprep.subr.bf16.mxu0 0
    %910 = vmatpush1.bf16.msra.mxu0 0
    %911 = vmatprep.subr.bf16.mxu0 0
    %912 = vmatpush1.bf16.msra.mxu0 0
    %913 = vmatprep.mubr.bf16.mxu0 0
    %914 = vmatmul.mubr.bf16.gmra.mrb[0].mxu0 %v785
    %v915 = vpop.f32.mrb[0].mxu0
    %v916 = vadd.f32 %v746, %v915
    %v917 = vpop.f32.mrb[0].mxu0
    %v918 = vadd.f32 %v750, %v917
    %v919 = vpop.f32.mrb[0].mxu0
    %v920 = vadd.f32 %v746, %v919
    %v921 = vpop.f32.mrb[0].mxu0
    %v922 = vadd.f32 %v750, %v921
    %923 = vmatprep.mubr.bf16.mxu0 0
    %924 = vmatmul.mubr.bf16.gmra.mrb[0].mxu0 %v786
    %v925 = vpop.f32.mrb[0].mxu0
    %v926 = vadd.f32 %v746, %v925
    %v927 = vpop.f32.mrb[0].mxu0
    %v928 = vadd.f32 %v750, %v927
    %v929 = vpop.f32.mrb[0].mxu0
    %v930 = vadd.f32 %v746, %v929
    %v931 = vpop.f32.mrb[0].mxu0
    %v932 = vadd.f32 %v750, %v931
    %933 = vmatprep.mubr.bf16.mxu0 0
    %934 = vmatmul.mubr.bf16.gmra.mrb[0].mxu0 %v787
    %v935 = vpop.f32.mrb[0].mxu0
    %v936 = vadd.f32 %v746, %v935
    %v937 = vpop.f32.mrb[0].mxu0
    %v938 = vadd.f32 %v750, %v937
    %v939 = vpop.f32.mrb[0].mxu0
    %v940 = vadd.f32 %v746, %v939
    %v941 = vpop.f32.mrb[0].mxu0
    %v942 = vadd.f32 %v750, %v941
    %943 = vmatprep.mubr.bf16.mxu0 0
    %944 = vmatmul.mubr.bf16.gmra.mrb[0].mxu0 %v788
    %v945 = vpop.f32.mrb[0].mxu0
    %v946 = vadd.f32 %v746, %v945
    %v947 = vpop.f32.mrb[0].mxu0
    %v948 = vadd.f32 %v750, %v947
    %v949 = vpop.f32.mrb[0].mxu0
    %v950 = vadd.f32 %v746, %v949
    %v951 = vpop.f32.mrb[0].mxu0
    %v952 = vadd.f32 %v750, %v951
    %953 = vmatprep.mubr.bf16.mxu0 0
    %954 = vmatmul.mubr.bf16.gmra.mrb[0].mxu0 %v789
    %v955 = vpop.f32.mrb[0].mxu0
    %v956 = vadd.f32 %v746, %v955
    %v957 = vpop.f32.mrb[0].mxu0
    %v958 = vadd.f32 %v750, %v957
    %v959 = vpop.f32.mrb[0].mxu0
    %v960 = vadd.f32 %v746, %v959
    %v961 = vpop.f32.mrb[0].mxu0
    %v962 = vadd.f32 %v750, %v961
    %963 = vmatprep.mubr.bf16.mxu0 0
    %964 = vmatmul.mubr.bf16.gmra.mrb[0].mxu0 %v790
    %v965 = vpop.f32.mrb[0].mxu0
    %v966 = vadd.f32 %v746, %v965
    %v967 = vpop.f32.mrb[0].mxu0
    %v968 = vadd.f32 %v750, %v967
    %v969 = vpop.f32.mrb[0].mxu0
    %v970 = vadd.f32 %v746, %v969
    %v971 = vpop.f32.mrb[0].mxu0
    %v972 = vadd.f32 %v750, %v971
    %973 = vmatprep.mubr.bf16.mxu0 0
    %974 = vmatmul.mubr.bf16.gmra.mrb[0].mxu0 %v791
    %v975 = vpop.f32.mrb[0].mxu0
    %v976 = vadd.f32 %v746, %v975
    %v977 = vpop.f32.mrb[0].mxu0
    %v978 = vadd.f32 %v750, %v977
    %v979 = vpop.f32.mrb[0].mxu0
    %v980 = vadd.f32 %v746, %v979
    %v981 = vpop.f32.mrb[0].mxu0
    %v982 = vadd.f32 %v750, %v981
    %983 = vmatprep.mubr.bf16.mxu0 0
    %984 = vmatmul.mubr.bf16.gmra.mrb[0].mxu0 %v792
    %v985 = vpop.f32.mrb[0].mxu0
    %v986 = vadd.f32 %v746, %v985
    %v987 = vpop.f32.mrb[0].mxu0
    %v988 = vadd.f32 %v750, %v987
    %v989 = vpop.f32.mrb[0].mxu0
    %v990 = vadd.f32 %v746, %v989
    %v991 = vpop.f32.mrb[0].mxu0
    %v992 = vadd.f32 %v750, %v991
    %993 = vdwg.mxu0
    %v994 = vxor.u32 %v916, 2147483648
    %v995 = vxor.u32 %v920, 2147483648
    %v996 = vxor.u32 %v926, 2147483648
    %v997 = vxor.u32 %v930, 2147483648
    %v998 = vxor.u32 %v936, 2147483648
    %v999 = vxor.u32 %v940, 2147483648
    %v1000 = vxor.u32 %v946, 2147483648
    %v1001 = vxor.u32 %v950, 2147483648
    %v1002 = vxor.u32 %v956, 2147483648
    %v1003 = vxor.u32 %v960, 2147483648
    %v1004 = vxor.u32 %v966, 2147483648
    %v1005 = vxor.u32 %v970, 2147483648
    %v1006 = vxor.u32 %v976, 2147483648
    %v1007 = vxor.u32 %v980, 2147483648
    %v1008 = vxor.u32 %v986, 2147483648
    %v1009 = vxor.u32 %v990, 2147483648
    %v1010 = vmul.f32 %v994, 1.442695
    %v1011 = vpow.pop %v1010
    %v1012 = vmul.f32 %v995, 1.442695
    %v1013 = vpow.pop %v1012
    %v1014 = vmul.f32 %v996, 1.442695
    %v1015 = vpow.pop %v1014
    %v1016 = vmul.f32 %v997, 1.442695
    %v1017 = vpow.pop %v1016
    %v1018 = vmul.f32 %v998, 1.442695
    %v1019 = vpow.pop %v1018
    %v1020 = vmul.f32 %v999, 1.442695
    %v1021 = vpow.pop %v1020
    %v1022 = vmul.f32 %v1000, 1.442695
    %v1023 = vpow.pop %v1022
    %v1024 = vmul.f32 %v1001, 1.442695
    %v1025 = vpow.pop %v1024
    %v1026 = vmul.f32 %v1002, 1.442695
    %v1027 = vpow.pop %v1026
    %v1028 = vmul.f32 %v1003, 1.442695
    %v1029 = vpow.pop %v1028
    %v1030 = vmul.f32 %v1004, 1.442695
    %v1031 = vpow.pop %v1030
    %v1032 = vmul.f32 %v1005, 1.442695
    %v1033 = vpow.pop %v1032
    %v1034 = vmul.f32 %v1006, 1.442695
    %v1035 = vpow.pop %v1034
    %v1036 = vmul.f32 %v1007, 1.442695
    %v1037 = vpow.pop %v1036
    %v1038 = vmul.f32 %v1008, 1.442695
    %v1039 = vpow.pop %v1038
    %v1040 = vmul.f32 %v1009, 1.442695
    %v1041 = vpow.pop %v1040
    %v1042 = vadd.f32 %v1011, 1.0
    %v1043 = vadd.f32 %v1013, 1.0
    %v1044 = vadd.f32 %v1015, 1.0
    %v1045 = vadd.f32 %v1017, 1.0
    %v1046 = vadd.f32 %v1019, 1.0
    %v1047 = vadd.f32 %v1021, 1.0
    %v1048 = vadd.f32 %v1023, 1.0
    %v1049 = vadd.f32 %v1025, 1.0
    %v1050 = vadd.f32 %v1027, 1.0
    %v1051 = vadd.f32 %v1029, 1.0
    %v1052 = vadd.f32 %v1031, 1.0
    %v1053 = vadd.f32 %v1033, 1.0
    %v1054 = vadd.f32 %v1035, 1.0
    %v1055 = vadd.f32 %v1037, 1.0
    %v1056 = vadd.f32 %v1039, 1.0
    %v1057 = vadd.f32 %v1041, 1.0
    %v1058 = vrcp.pop %v1042
    %v1059 = vmul.f32 1.0, %v1058
    %v1060 = vrcp.pop %v1043
    %v1061 = vmul.f32 1.0, %v1060
    %v1062 = vrcp.pop %v1044
    %v1063 = vmul.f32 1.0, %v1062
    %v1064 = vrcp.pop %v1045
    %v1065 = vmul.f32 1.0, %v1064
    %v1066 = vrcp.pop %v1046
    %v1067 = vmul.f32 1.0, %v1066
    %v1068 = vrcp.pop %v1047
    %v1069 = vmul.f32 1.0, %v1068
    %v1070 = vrcp.pop %v1048
    %v1071 = vmul.f32 1.0, %v1070
    %v1072 = vrcp.pop %v1049
    %v1073 = vmul.f32 1.0, %v1072
    %v1074 = vrcp.pop %v1050
    %v1075 = vmul.f32 1.0, %v1074
    %v1076 = vrcp.pop %v1051
    %v1077 = vmul.f32 1.0, %v1076
    %v1078 = vrcp.pop %v1052
    %v1079 = vmul.f32 1.0, %v1078
    %v1080 = vrcp.pop %v1053
    %v1081 = vmul.f32 1.0, %v1080
    %v1082 = vrcp.pop %v1054
    %v1083 = vmul.f32 1.0, %v1082
    %v1084 = vrcp.pop %v1055
    %v1085 = vmul.f32 1.0, %v1084
    %v1086 = vrcp.pop %v1056
    %v1087 = vmul.f32 1.0, %v1086
    %v1088 = vrcp.pop %v1057
    %v1089 = vmul.f32 1.0, %v1088
    %v1090 = vmul.f32 %v916, %v1059
    %v1091 = vmul.f32 %v920, %v1061
    %v1092 = vmul.f32 %v926, %v1063
    %v1093 = vmul.f32 %v930, %v1065
    %v1094 = vmul.f32 %v936, %v1067
    %v1095 = vmul.f32 %v940, %v1069
    %v1096 = vmul.f32 %v946, %v1071
    %v1097 = vmul.f32 %v950, %v1073
    %v1098 = vmul.f32 %v956, %v1075
    %v1099 = vmul.f32 %v960, %v1077
    %v1100 = vmul.f32 %v966, %v1079
    %v1101 = vmul.f32 %v970, %v1081
    %v1102 = vmul.f32 %v976, %v1083
    %v1103 = vmul.f32 %v980, %v1085
    %v1104 = vmul.f32 %v986, %v1087
    %v1105 = vmul.f32 %v990, %v1089
    %v1106 = vmul.f32 %v1090, %v918
    %v1107 = vmul.f32 %v1091, %v922
    %v1108 = vmul.f32 %v1092, %v928
    %v1109 = vmul.f32 %v1093, %v932
    %v1110 = vmul.f32 %v1094, %v938
    %v1111 = vmul.f32 %v1095, %v942
    %v1112 = vmul.f32 %v1096, %v948
    %v1113 = vmul.f32 %v1097, %v952
    %v1114 = vmul.f32 %v1098, %v958
    %v1115 = vmul.f32 %v1099, %v962
    %v1116 = vmul.f32 %v1100, %v968
    %v1117 = vmul.f32 %v1101, %v972
    %v1118 = vmul.f32 %v1102, %v978
    %v1119 = vmul.f32 %v1103, %v982
    %v1120 = vmul.f32 %v1104, %v988
    %v1121 = vmul.f32 %v1105, %v992
    %v1122 = vpack.c.bf16 %v1107, %v1106
    %v1123 = vpack.c.bf16 %v1109, %v1108
    %v1124 = vpack.c.bf16 %v1111, %v1110
    %v1125 = vpack.c.bf16 %v1113, %v1112
    %v1126 = vpack.c.bf16 %v1115, %v1114
    %v1127 = vpack.c.bf16 %v1117, %v1116
    %v1128 = vpack.c.bf16 %v1119, %v1118
    %v1129 = vpack.c.bf16 %v1121, %v1120
    %v1130 = vld [vmem:[#allocation11] sm:$0xf]
    %v1131 = vld [vmem:[#allocation11 + $0x4] sm:$0xf]
    %v1132 = vld [vmem:[#allocation11 + $0x8] sm:$0xf]
    %v1133 = vld [vmem:[#allocation11 + $0xc] sm:$0xf]
    %v1134 = vld [vmem:[#allocation11 + $0x10] sm:$0xf]
    %v1135 = vld [vmem:[#allocation11 + $0x14] sm:$0xf]
    %v1136 = vld [vmem:[#allocation11 + $0x18] sm:$0xf]
    %v1137 = vld [vmem:[#allocation11 + $0x1c] sm:$0xf]
    %v1138 = vld [vmem:[#allocation11 + $0x20] sm:$0xf]
    %v1139 = vld [vmem:[#allocation11 + $0x24] sm:$0xf]
    %v1140 = vld [vmem:[#allocation11 + $0x28] sm:$0xf]
    %v1141 = vld [vmem:[#allocation11 + $0x2c] sm:$0xf]
    %v1142 = vld [vmem:[#allocation11 + $0x30] sm:$0xf]
    %v1143 = vld [vmem:[#allocation11 + $0x34] sm:$0xf]
    %v1144 = vld [vmem:[#allocation11 + $0x38] sm:$0xf]
    %v1145 = vld [vmem:[#allocation11 + $0x3c] sm:$0xf]
    %v1146 = vld [vmem:[%s9] sm:$0x1]
    %v1148 = vlaneseq
    %v1149 = vshrl.u32 %v1148, 7
    %v1150 = vsub.s32 0, %v1149
    %v1151 = vrot.slane %v1146, %v1150
    %v1169 = vunpack.c.l.b16 %v1130
    %v1170 = vunpack.c.l.b16 %v1131
    %v1171 = vunpack.c.l.b16 %v1132
    %v1172 = vunpack.c.l.b16 %v1133
    %v1173 = vunpack.c.l.b16 %v1134
    %v1174 = vunpack.c.l.b16 %v1135
    %v1175 = vunpack.c.l.b16 %v1136
    %v1176 = vunpack.c.l.b16 %v1137
    %v1177 = vunpack.c.l.b16 %v1138
    %v1178 = vunpack.c.l.b16 %v1139
    %v1179 = vunpack.c.l.b16 %v1140
    %v1180 = vunpack.c.l.b16 %v1141
    %v1181 = vunpack.c.l.b16 %v1142
    %v1182 = vunpack.c.l.b16 %v1143
    %v1183 = vunpack.c.l.b16 %v1144
    %v1184 = vunpack.c.l.b16 %v1145
    %v1185 = vpack.c.b16 %v1170, %v1169
    %v1186 = vpack.c.b16 %v1172, %v1171
    %v1187 = vpack.c.b16 %v1174, %v1173
    %v1188 = vpack.c.b16 %v1176, %v1175
    %v1189 = vpack.c.b16 %v1178, %v1177
    %v1190 = vpack.c.b16 %v1180, %v1179
    %v1191 = vpack.c.b16 %v1182, %v1181
    %v1192 = vpack.c.b16 %v1184, %v1183
    %1201 = vmatprep.subr.bf16.mxu0 0
    %1202 = vmatpush1.bf16.msra.mxu0 %v1185
    %1203 = vmatprep.subr.bf16.mxu0 0
    %1204 = vmatpush1.bf16.msra.mxu0 %v1186
    %1205 = vmatprep.subr.bf16.mxu0 0
    %1206 = vmatpush1.bf16.msra.mxu0 %v1187
    %1207 = vmatprep.subr.bf16.mxu0 0
    %1208 = vmatpush1.bf16.msra.mxu0 %v1188
    %1209 = vmatprep.subr.bf16.mxu0 0
    %1210 = vmatpush1.bf16.msra.mxu0 %v1189
    %1211 = vmatprep.subr.bf16.mxu0 0
    %1212 = vmatpush1.bf16.msra.mxu0 %v1190
    %1213 = vmatprep.subr.bf16.mxu0 0
    %1214 = vmatpush1.bf16.msra.mxu0 %v1191
    %1215 = vmatprep.subr.bf16.mxu0 0
    %1216 = vmatpush1.bf16.msra.mxu0 %v1192
    %1217 = vmatprep.subr.bf16.mxu0 0
    %1218 = vmatpush1.bf16.msra.mxu0 0
    %1219 = vmatprep.subr.bf16.mxu0 0
    %1220 = vmatpush1.bf16.msra.mxu0 0
    %1221 = vmatprep.subr.bf16.mxu0 0
    %1222 = vmatpush1.bf16.msra.mxu0 0
    %1223 = vmatprep.subr.bf16.mxu0 0
    %1224 = vmatpush1.bf16.msra.mxu0 0
    %1225 = vmatprep.subr.bf16.mxu0 0
    %1226 = vmatpush1.bf16.msra.mxu0 0
    %1227 = vmatprep.subr.bf16.mxu0 0
    %1228 = vmatpush1.bf16.msra.mxu0 0
    %1229 = vmatprep.subr.bf16.mxu0 0
    %1230 = vmatpush1.bf16.msra.mxu0 0
    %1231 = vmatprep.subr.bf16.mxu0 0
    %1232 = vmatpush1.bf16.msra.mxu0 0
    %1233 = vmatprep.mubr.bf16.mxu0 0
    %1234 = vmatmul.mubr.bf16.gmra.mrb[0].mxu0 %v1122
    %v1235 = vpop.f32.mrb[0].mxu0
    %v1236 = vadd.f32 %v1151, %v1235
    %v1237 = vpop.f32.mrb[0].mxu0
    %v1238 = vpop.f32.mrb[0].mxu0
    %v1239 = vadd.f32 %v1151, %v1238
    %v1240 = vpop.f32.mrb[0].mxu0
    %1241 = vmatprep.mubr.bf16.mxu0 0
    %1242 = vmatmul.mubr.bf16.gmra.mrb[0].mxu0 %v1123
    %v1243 = vpop.f32.mrb[0].mxu0
    %v1244 = vadd.f32 %v1151, %v1243
    %v1245 = vpop.f32.mrb[0].mxu0
    %v1246 = vpop.f32.mrb[0].mxu0
    %v1247 = vadd.f32 %v1151, %v1246
    %v1248 = vpop.f32.mrb[0].mxu0
    %1249 = vmatprep.mubr.bf16.mxu0 0
    %1250 = vmatmul.mubr.bf16.gmra.mrb[0].mxu0 %v1124
    %v1251 = vpop.f32.mrb[0].mxu0
    %v1252 = vadd.f32 %v1151, %v1251
    %v1253 = vpop.f32.mrb[0].mxu0
    %v1254 = vpop.f32.mrb[0].mxu0
    %v1255 = vadd.f32 %v1151, %v1254
    %v1256 = vpop.f32.mrb[0].mxu0
    %1257 = vmatprep.mubr.bf16.mxu0 0
    %1258 = vmatmul.mubr.bf16.gmra.mrb[0].mxu0 %v1125
    %v1259 = vpop.f32.mrb[0].mxu0
    %v1260 = vadd.f32 %v1151, %v1259
    %v1261 = vpop.f32.mrb[0].mxu0
    %v1262 = vpop.f32.mrb[0].mxu0
    %v1263 = vadd.f32 %v1151, %v1262
    %v1264 = vpop.f32.mrb[0].mxu0
    %1265 = vmatprep.mubr.bf16.mxu0 0
    %1266 = vmatmul.mubr.bf16.gmra.mrb[0].mxu0 %v1126
    %v1267 = vpop.f32.mrb[0].mxu0
    %v1268 = vadd.f32 %v1151, %v1267
    %v1269 = vpop.f32.mrb[0].mxu0
    %v1270 = vpop.f32.mrb[0].mxu0
    %v1271 = vadd.f32 %v1151, %v1270
    %v1272 = vpop.f32.mrb[0].mxu0
    %1273 = vmatprep.mubr.bf16.mxu0 0
    %1274 = vmatmul.mubr.bf16.gmra.mrb[0].mxu0 %v1127
    %v1275 = vpop.f32.mrb[0].mxu0
    %v1276 = vadd.f32 %v1151, %v1275
    %v1277 = vpop.f32.mrb[0].mxu0
    %v1278 = vpop.f32.mrb[0].mxu0
    %v1279 = vadd.f32 %v1151, %v1278
    %v1280 = vpop.f32.mrb[0].mxu0
    %1281 = vmatprep.mubr.bf16.mxu0 0
    %1282 = vmatmul.mubr.bf16.gmra.mrb[0].mxu0 %v1128
    %v1283 = vpop.f32.mrb[0].mxu0
    %v1284 = vadd.f32 %v1151, %v1283
    %v1285 = vpop.f32.mrb[0].mxu0
    %v1286 = vpop.f32.mrb[0].mxu0
    %v1287 = vadd.f32 %v1151, %v1286
    %v1288 = vpop.f32.mrb[0].mxu0
    %1289 = vmatprep.mubr.bf16.mxu0 0
    %1290 = vmatmul.mubr.bf16.gmra.mrb[0].mxu0 %v1129
    %v1291 = vpop.f32.mrb[0].mxu0
    %v1292 = vadd.f32 %v1151, %v1291
    %v1293 = vpop.f32.mrb[0].mxu0
    %v1294 = vpop.f32.mrb[0].mxu0
    %v1295 = vadd.f32 %v1151, %v1294
    %v1296 = vpop.f32.mrb[0].mxu0
    %1297 = vdwg.mxu0
    %v1298 = vmul.f32 %v647, %v1236
    %v1299 = vmul.f32 %v650, %v1239
    %v1300 = vmul.f32 %v655, %v1244
    %v1301 = vmul.f32 %v658, %v1247
    %v1302 = vmul.f32 %v663, %v1252
    %v1303 = vmul.f32 %v666, %v1255
    %v1304 = vmul.f32 %v671, %v1260
    %v1305 = vmul.f32 %v674, %v1263
    %v1306 = vmul.f32 %v679, %v1268
    %v1307 = vmul.f32 %v682, %v1271
    %v1308 = vmul.f32 %v687, %v1276
    %v1309 = vmul.f32 %v690, %v1279
    %v1310 = vmul.f32 %v695, %v1284
    %v1311 = vmul.f32 %v698, %v1287
    %v1312 = vmul.f32 %v703, %v1292
    %v1313 = vmul.f32 %v706, %v1295
    %v1314 = vpack.c.bf16 %v1299, %v1298
    %v1315 = vpack.c.bf16 %v1301, %v1300
    %v1316 = vpack.c.bf16 %v1303, %v1302
    %v1317 = vpack.c.bf16 %v1305, %v1304
    %v1318 = vpack.c.bf16 %v1307, %v1306
    %v1319 = vpack.c.bf16 %v1309, %v1308
    %v1320 = vpack.c.bf16 %v1311, %v1310
    %v1321 = vpack.c.bf16 %v1313, %v1312
    %1322 = vmatprep.subr.bf16.mxu0 0
    %1323 = vmatpush1.bf16.xpose.msra.mxu0 %v1314
    %1324 = vmatprep.subr.bf16.mxu0 0
    %1325 = vmatpush1.bf16.xpose.msra.mxu0 %v1315
    %1326 = vmatprep.subr.bf16.mxu0 0
    %1327 = vmatpush1.bf16.xpose.msra.mxu0 %v1316
    %1328 = vmatprep.subr.bf16.mxu0 0
    %1329 = vmatpush1.bf16.xpose.msra.mxu0 %v1317
    %1330 = vmatprep.subr.bf16.mxu0 0
    %1331 = vmatpush1.bf16.xpose.msra.mxu0 %v1318
    %1332 = vmatprep.subr.bf16.mxu0 0
    %1333 = vmatpush1.bf16.xpose.msra.mxu0 %v1319
    %1334 = vmatprep.subr.bf16.mxu0 0
    %1335 = vmatpush1.bf16.xpose.msra.mxu0 %v1320
    %1336 = vmatprep.subr.bf16.mxu0 0
    %1337 = vmatpush1.bf16.xpose.msra.mxu0 %v1321
    %1338 = vmatprep.subr.bf16.mxu0 0
    %1339 = vmatpush1.bf16.xpose.msra.mxu0 0
    %1340 = vmatprep.subr.bf16.mxu0 0
    %1341 = vmatpush1.bf16.xpose.msra.mxu0 0
    %1342 = vmatprep.subr.bf16.mxu0 0
    %1343 = vmatpush1.bf16.xpose.msra.mxu0 0
    %1344 = vmatprep.subr.bf16.mxu0 0
    %1345 = vmatpush1.bf16.xpose.msra.mxu0 0
    %1346 = vmatprep.subr.bf16.mxu0 0
    %1347 = vmatpush1.bf16.xpose.msra.mxu0 0
    %1348 = vmatprep.subr.bf16.mxu0 0
    %1349 = vmatpush1.bf16.xpose.msra.mxu0 0
    %1350 = vmatprep.subr.bf16.mxu0 0
    %1351 = vmatpush1.bf16.xpose.msra.mxu0 0
    %1352 = vmatprep.subr.bf16.mxu0 0
    %1353 = vmatpush1.bf16.xpose.msra.mxu0 0
    %1354 = vmatprep.mubr.bf16.mxu0 0
    %1355 = vmatmul.mubr.bf16.gmra.mrb[0].mxu0 1065369472
    %v1356 = vpop.f32.mrb[0].mxu0
    %v1357 = vadd.f32 0.0, %v1356
    %v1358 = vpop.f32.mrb[0].mxu0
    %v1359 = vpop.f32.mrb[0].mxu0
    %v1360 = vpop.f32.mrb[0].mxu0
    %1361 = vdwg.mxu0
    %1362 = vst [vmem:[#allocation13] sm:$0x1] %v1357
    // Predicated region
    $region66: #{tpu_custom_call.1} parent=1 // pred_check
      _
    $region67: #{tpu_custom_call.1} parent=1 // pred_check_branch
      %1364 = sbr.rel (0) target = $region69
    $region68: #{tpu_custom_call.1} parent=1 // pred_region
      %s1366 = ssub.s32 16, 16
      %1367 = vsyncadd [#allocation4], %s1366
      %s1369 = sshll.u32 [#allocation13], 4
      %s1370 = int_to_ptr.vmem [resolvable:$true] %s1369
      %1372 = dma.vmem_to_hbm [thread:$0]  %s1370, 16, %s10, [#allocation4]
    $region69: #{tpu_custom_call.1} parent=1 // pred_fallthru
      _
    // Predicated region
    $region70: #{tpu_custom_call.1} parent=1 // pred_check
      _
    $region71: #{tpu_custom_call.1} parent=1 // pred_check_branch
      %1374 = sbr.rel (0) target = $region73
    $region72: #{tpu_custom_call.1} parent=1 // pred_region
      %1375 = dma.done [#allocation4], 16
    $region73: #{tpu_custom_call.1} parent=1 // pred_fallthru
      _
    %1376 = vsyncpa [#allocation3], 1
    %1377 = vsyncpa [#allocation6], 1
    %1378 = vsyncpa [#allocation9], 1
    %1379 = vsyncpa [#allocation12], 1
    %1380 = vsyncpa [#allocation4], 1

// kernel: tpu_custom_call.1
$region0: #{tpu_custom_call.1}
  #allocation0 [shape = 'u32[]', space=smem, size = 0x4, offset = 0x4, fixed_abs, tag = 'smem constant byte address 0x4 - core index']
  #allocation1 [shape = 'u32[144,128]{1,0:T(1,128)}', space=vmem, size = 0x12000, scoped, tag = 'internal scratch']
  %s0 = inlined_call_operand.hbm [shape: bf16[128,128], index: 0, kind: input, shape index: {}]
  %s1 = inlined_call_operand.hbm [shape: bf16[128,128], index: 1, kind: input, shape index: {}]
  %s2 = inlined_call_operand.hbm [shape: bf16[128,256], index: 2, kind: input, shape index: {}]
  %s3 = inlined_call_operand.vmem [shape: f32[1,256], index: 3, kind: input, shape index: {}]
  %s4 = inlined_call_operand.hbm [shape: bf16[128,128], index: 4, kind: input, shape index: {}]
  %s5 = inlined_call_operand.vmem [shape: f32[1,128], index: 5, kind: input, shape index: {}]
  %s6 = inlined_call_operand.hbm [shape: bf16[128,256], index: 6, kind: input, shape index: {}]
  %s7 = inlined_call_operand.vmem [shape: f32[1,256], index: 7, kind: input, shape index: {}]
  %s8 = inlined_call_operand.hbm [shape: bf16[128,128], index: 8, kind: input, shape index: {}]
  %s9 = inlined_call_operand.vmem [shape: f32[1,128], index: 9, kind: input, shape index: {}]
  %s10 = inlined_call_operand.hbm [shape: f32[1,128], index: 10, kind: output, shape index: {}]
  %s11 = sld [smem:[#allocation0]]
  $region74: #{tpu_custom_call.1} parent=0
    _
  %s13 = ssub.s32 1, %s11
  %s14 = scalar_select 0, %s13, %s11
  $region1: #{tpu_custom_call.1} parent=0
    #allocation2 [shape = 'u8[32768]{0}', space=vmem, size = 0x8000, scoped, tag = 'input window, operand 0, single buffered']
    #allocation3 [shape = 's32[1]{0}', space=sflag, size = 0x4, scoped, tag = 'scoped memory for tpu_custom_call.1']
    #allocation4 [shape = 's32[1]{0}', space=sflag, size = 0x4, scoped, tag = 'scoped memory for tpu_custom_call.1']
    #allocation5 [shape = 'u8[32768]{0}', space=vmem, size = 0x8000, scoped, tag = 'input window, operand 1, single buffered']
    #allocation6 [shape = 's32[1]{0}', space=sflag, size = 0x4, scoped, tag = 'scoped memory for tpu_custom_call.1']
    #allocation7 [shape = 'u8[65536]{0}', space=vmem, size = 0x10000, scoped, tag = 'input window, operand 2, single buffered']
    #allocation8 [shape = 'u8[32768]{0}', space=vmem, size = 0x8000, scoped, tag = 'input window, operand 4, single buffered']
    #allocation9 [shape = 's32[1]{0}', space=sflag, size = 0x4, scoped, tag = 'scoped memory for tpu_custom_call.1']
    #allocation10 [shape = 'u8[65536]{0}', space=vmem, size = 0x10000, scoped, tag = 'input window, operand 6, single buffered']
    #allocation11 [shape = 'u8[32768]{0}', space=vmem, size = 0x8000, scoped, tag = 'input window, operand 8, single buffered']
    #allocation12 [shape = 's32[1]{0}', space=sflag, size = 0x4, scoped, tag = 'scoped memory for tpu_custom_call.1']
    #allocation13 [shape = 'u8[512]{0}', space=vmem, size = 0x400, scoped, tag = 'output window, operand 0, single buffered']
    %15 = vsyncpa [#allocation3], 0
    %16 = vsyncpa [#allocation6], 0
    %17 = vsyncpa [#allocation9], 0
    %18 = vsyncpa [#allocation12], 0
    %19 = vsyncpa [#allocation4], 0
    // Predicated region
    $region2: #{tpu_custom_call.1} parent=1 // pred_check
      _
    $region3: #{tpu_custom_call.1} parent=1 // pred_check_branch
      %21 = sbr.rel (0) target = $region5
    $region4: #{tpu_custom_call.1} parent=1 // pred_region
      %s23 = ssub.s32 1024, 1024
      %24 = vsyncadd [#allocation3], %s23
      %s25 = sshll.u32 [#allocation2], 4
      %s26 = int_to_ptr.vmem [resolvable:$true] %s25
      %31 = dma.hbm_to_vmem [thread:$0]  %s0, 1024, %s26, [#allocation3], 64, 64, 4
    $region5: #{tpu_custom_call.1} parent=1 // pred_fallthru
      _
    // Predicated region
    $region6: #{tpu_custom_call.1} parent=1 // pred_check
      _
    $region7: #{tpu_custom_call.1} parent=1 // pred_check_branch
      %33 = sbr.rel (0) target = $region9
    $region8: #{tpu_custom_call.1} parent=1 // pred_region
      %s35 = ssub.s32 1024, 1024
      %36 = vsyncadd [#allocation6], %s35
      %s37 = sshll.u32 [#allocation5], 4
      %s38 = int_to_ptr.vmem [resolvable:$true] %s37
      %43 = dma.hbm_to_vmem [thread:$0]  %s1, 1024, %s38, [#allocation6], 64, 64, 4
    $region9: #{tpu_custom_call.1} parent=1 // pred_fallthru
      _
    // Predicated region
    $region10: #{tpu_custom_call.1} parent=1 // pred_check
      _
    $region11: #{tpu_custom_call.1} parent=1 // pred_check_branch
      %45 = sbr.rel (0) target = $region13
    $region12: #{tpu_custom_call.1} parent=1 // pred_region
      %s47 = ssub.s32 2048, 2048
      %48 = vsyncadd [#allocation6], %s47
      %s49 = sshll.u32 [#allocation7], 4
      %s50 = int_to_ptr.vmem [resolvable:$true] %s49
      %55 = dma.hbm_to_vmem [thread:$0]  %s2, 2048, %s50, [#allocation6], 128, 128, 8
    $region13: #{tpu_custom_call.1} parent=1 // pred_fallthru
      _
    // Predicated region
    $region14: #{tpu_custom_call.1} parent=1 // pred_check
      _
    $region15: #{tpu_custom_call.1} parent=1 // pred_check_branch
      %57 = sbr.rel (0) target = $region17
    $region16: #{tpu_custom_call.1} parent=1 // pred_region
      _
    $region17: #{tpu_custom_call.1} parent=1 // pred_fallthru
      _
    // Predicated region
    $region18: #{tpu_custom_call.1} parent=1 // pred_check
      _
    $region19: #{tpu_custom_call.1} parent=1 // pred_check_branch
      %59 = sbr.rel (0) target = $region21
    $region20: #{tpu_custom_call.1} parent=1 // pred_region
      %s61 = ssub.s32 1024, 1024
      %62 = vsyncadd [#allocation9], %s61
      %s63 = sshll.u32 [#allocation8], 4
      %s64 = int_to_ptr.vmem [resolvable:$true] %s63
      %69 = dma.hbm_to_vmem [thread:$0]  %s4, 1024, %s64, [#allocation9], 64, 64, 4
    $region21: #{tpu_custom_call.1} parent=1 // pred_fallthru
      _
    // Predicated region
    $region22: #{tpu_custom_call.1} parent=1 // pred_check
      _
    $region23: #{tpu_custom_call.1} parent=1 // pred_check_branch
      %71 = sbr.rel (0) target = $region25
    $region24: #{tpu_custom_call.1} parent=1 // pred_region
      _
    $region25: #{tpu_custom_call.1} parent=1 // pred_fallthru
      _
    // Predicated region
    $region26: #{tpu_custom_call.1} parent=1 // pred_check
      _
    $region27: #{tpu_custom_call.1} parent=1 // pred_check_branch
      %73 = sbr.rel (0) target = $region29
    $region28: #{tpu_custom_call.1} parent=1 // pred_region
      %s75 = ssub.s32 2048, 2048
      %76 = vsyncadd [#allocation9], %s75
      %s77 = sshll.u32 [#allocation10], 4
      %s78 = int_to_ptr.vmem [resolvable:$true] %s77
      %83 = dma.hbm_to_vmem [thread:$0]  %s6, 2048, %s78, [#allocation9], 128, 128, 8
    $region29: #{tpu_custom_call.1} parent=1 // pred_fallthru
      _
    // Predicated region
    $region30: #{tpu_custom_call.1} parent=1 // pred_check
      _
    $region31: #{tpu_custom_call.1} parent=1 // pred_check_branch
      %85 = sbr.rel (0) target = $region33
    $region32: #{tpu_custom_call.1} parent=1 // pred_region
      _
    $region33: #{tpu_custom_call.1} parent=1 // pred_fallthru
      _
    // Predicated region
    $region34: #{tpu_custom_call.1} parent=1 // pred_check
      _
    $region35: #{tpu_custom_call.1} parent=1 // pred_check_branch
      %87 = sbr.rel (0) target = $region37
    $region36: #{tpu_custom_call.1} parent=1 // pred_region
      %s89 = ssub.s32 1024, 1024
      %90 = vsyncadd [#allocation12], %s89
      %s91 = sshll.u32 [#allocation11], 4
      %s92 = int_to_ptr.vmem [resolvable:$true] %s91
      %97 = dma.hbm_to_vmem [thread:$0]  %s8, 1024, %s92, [#allocation12], 64, 64, 4
    $region37: #{tpu_custom_call.1} parent=1 // pred_fallthru
      _
    // Predicated region
    $region38: #{tpu_custom_call.1} parent=1 // pred_check
      _
    $region39: #{tpu_custom_call.1} parent=1 // pred_check_branch
      %99 = sbr.rel (0) target = $region41
    $region40: #{tpu_custom_call.1} parent=1 // pred_region
      _
    $region41: #{tpu_custom_call.1} parent=1 // pred_fallthru
      _
    // Predicated region
    $region42: #{tpu_custom_call.1} parent=1 // pred_check
      _
    $region43: #{tpu_custom_call.1} parent=1 // pred_check_branch
      %101 = sbr.rel (0) target = $region45
    $region44: #{tpu_custom_call.1} parent=1 // pred_region
      %102 = dma.done [#allocation3], 1024
    $region45: #{tpu_custom_call.1} parent=1 // pred_fallthru
      _
    // Predicated region
    $region46: #{tpu_custom_call.1} parent=1 // pred_check
      _
    $region47: #{tpu_custom_call.1} parent=1 // pred_check_branch
      %104 = sbr.rel (0) target = $region49
    $region48: #{tpu_custom_call.1} parent=1 // pred_region
      %105 = dma.done [#allocation6], 1024
    $region49: #{tpu_custom_call.1} parent=1 // pred_fallthru
      _
    // Predicated region
    $region50: #{tpu_custom_call.1} parent=1 // pred_check
      _
    $region51: #{tpu_custom_call.1} parent=1 // pred_check_branch
      %107 = sbr.rel (0) target = $region53
    $region52: #{tpu_custom_call.1} parent=1 // pred_region
      %108 = dma.done [#allocation6], 2048
    $region53: #{tpu_custom_call.1} parent=1 // pred_fallthru
      _
    // Predicated region
    $region54: #{tpu_custom_call.1} parent=1 // pred_check
      _
    $region55: #{tpu_custom_call.1} parent=1 // pred_check_branch
      %110 = sbr.rel (0) target = $region57
    $region56: #{tpu_custom_call.1} parent=1 // pred_region
      %111 = dma.done [#allocation9], 1024
    $region57: #{tpu_custom_call.1} parent=1 // pred_fallthru
      _
    // Predicated region
    $region58: #{tpu_custom_call.1} parent=1 // pred_check
      _
    $region59: #{tpu_custom_call.1} parent=1 // pred_check_branch
      %113 = sbr.rel (0) target = $region61
    $region60: #{tpu_custom_call.1} parent=1 // pred_region
      %114 = dma.done [#allocation9], 2048
    $region61: #{tpu_custom_call.1} parent=1 // pred_fallthru
      _
    // Predicated region
    $region62: #{tpu_custom_call.1} parent=1 // pred_check
      _
    $region63: #{tpu_custom_call.1} parent=1 // pred_check_branch
      %116 = sbr.rel (0) target = $region65
    $region64: #{tpu_custom_call.1} parent=1 // pred_region
      %117 = dma.done [#allocation12], 1024
    $region65: #{tpu_custom_call.1} parent=1 // pred_fallthru
      _
    %v120 = vld [vmem:[#allocation2] sm:$0xf]
    %v121 = vld [vmem:[#allocation2 + $0x4] sm:$0xf]
    %v122 = vld [vmem:[#allocation2 + $0x8] sm:$0xf]
    %v123 = vld [vmem:[#allocation2 + $0xc] sm:$0xf]
    %v124 = vld [vmem:[#allocation2 + $0x10] sm:$0xf]
    %v125 = vld [vmem:[#allocation2 + $0x14] sm:$0xf]
    %v126 = vld [vmem:[#allocation2 + $0x18] sm:$0xf]
    %v127 = vld [vmem:[#allocation2 + $0x1c] sm:$0xf]
    %v128 = vld [vmem:[#allocation2 + $0x20] sm:$0xf]
    %v129 = vld [vmem:[#allocation2 + $0x24] sm:$0xf]
    %v130 = vld [vmem:[#allocation2 + $0x28] sm:$0xf]
    %v131 = vld [vmem:[#allocation2 + $0x2c] sm:$0xf]
    %v132 = vld [vmem:[#allocation2 + $0x30] sm:$0xf]
    %v133 = vld [vmem:[#allocation2 + $0x34] sm:$0xf]
    %v134 = vld [vmem:[#allocation2 + $0x38] sm:$0xf]
    %v135 = vld [vmem:[#allocation2 + $0x3c] sm:$0xf]
    %v136 = vld [vmem:[#allocation7] sm:$0xff]
    %v137 = vld [vmem:[#allocation7 + $0x8] sm:$0xff]
    %v138 = vld [vmem:[#allocation7 + $0x10] sm:$0xff]
    %v139 = vld [vmem:[#allocation7 + $0x18] sm:$0xff]
    %v140 = vld [vmem:[#allocation7 + $0x20] sm:$0xff]
    %v141 = vld [vmem:[#allocation7 + $0x28] sm:$0xff]
    %v142 = vld [vmem:[#allocation7 + $0x30] sm:$0xff]
    %v143 = vld [vmem:[#allocation7 + $0x38] sm:$0xff]
    %v144 = vld [vmem:[#allocation7 + $0x40] sm:$0xff]
    %v145 = vld [vmem:[#allocation7 + $0x48] sm:$0xff]
    %v146 = vld [vmem:[#allocation7 + $0x50] sm:$0xff]
    %v147 = vld [vmem:[#allocation7 + $0x58] sm:$0xff]
    %v148 = vld [vmem:[#allocation7 + $0x60] sm:$0xff]
    %v149 = vld [vmem:[#allocation7 + $0x68] sm:$0xff]
    %v150 = vld [vmem:[#allocation7 + $0x70] sm:$0xff]
    %v151 = vld [vmem:[#allocation7 + $0x78] sm:$0xff]
    %v152 = vld [vmem:[%s3] sm:$0x3]
    %v154 = vlaneseq
    %v155 = vshrl.u32 %v154, 7
    %v156 = vsub.s32 0, %v155
    %v157 = vrot.slane %v152, %v156
    %v158 = vlaneseq
    %v159 = vshrl.u32 %v158, 7
    %v160 = vsub.s32 1, %v159
    %v161 = vrot.slane %v152, %v160
    %v180 = vunpack.c.l.b16 %v120
    %v181 = vunpack.c.l.b16 %v121
    %v182 = vunpack.c.l.b16 %v122
    %v183 = vunpack.c.l.b16 %v123
    %v184 = vunpack.c.l.b16 %v124
    %v185 = vunpack.c.l.b16 %v125
    %v186 = vunpack.c.l.b16 %v126
    %v187 = vunpack.c.l.b16 %v127
    %v188 = vunpack.c.l.b16 %v128
    %v189 = vunpack.c.l.b16 %v129
    %v190 = vunpack.c.l.b16 %v130
    %v191 = vunpack.c.l.b16 %v131
    %v192 = vunpack.c.l.b16 %v132
    %v193 = vunpack.c.l.b16 %v133
    %v194 = vunpack.c.l.b16 %v134
    %v195 = vunpack.c.l.b16 %v135
    %v196 = vpack.c.b16 %v181, %v180
    %v197 = vpack.c.b16 %v183, %v182
    %v198 = vpack.c.b16 %v185, %v184
    %v199 = vpack.c.b16 %v187, %v186
    %v200 = vpack.c.b16 %v189, %v188
    %v201 = vpack.c.b16 %v191, %v190
    %v202 = vpack.c.b16 %v193, %v192
    %v203 = vpack.c.b16 %v195, %v194
    %v228 = vunpack.c.l.b16 %v136
    %v229 = vunpack.c.h.b16 %v136
    %v230 = vunpack.c.l.b16 %v137
    %v231 = vunpack.c.h.b16 %v137
    %v232 = vunpack.c.l.b16 %v138
    %v233 = vunpack.c.h.b16 %v138
    %v234 = vunpack.c.l.b16 %v139
    %v235 = vunpack.c.h.b16 %v139
    %v236 = vunpack.c.l.b16 %v140
    %v237 = vunpack.c.h.b16 %v140
    %v238 = vunpack.c.l.b16 %v141
    %v239 = vunpack.c.h.b16 %v141
    %v240 = vunpack.c.l.b16 %v142
    %v241 = vunpack.c.h.b16 %v142
    %v242 = vunpack.c.l.b16 %v143
    %v243 = vunpack.c.h.b16 %v143
    %v244 = vunpack.c.l.b16 %v144
    %v245 = vunpack.c.h.b16 %v144
    %v246 = vunpack.c.l.b16 %v145
    %v247 = vunpack.c.h.b16 %v145
    %v248 = vunpack.c.l.b16 %v146
    %v249 = vunpack.c.h.b16 %v146
    %v250 = vunpack.c.l.b16 %v147
    %v251 = vunpack.c.h.b16 %v147
    %v252 = vunpack.c.l.b16 %v148
    %v253 = vunpack.c.h.b16 %v148
    %v254 = vunpack.c.l.b16 %v149
    %v255 = vunpack.c.h.b16 %v149
    %v256 = vunpack.c.l.b16 %v150
    %v257 = vunpack.c.h.b16 %v150
    %v258 = vunpack.c.l.b16 %v151
    %v259 = vunpack.c.h.b16 %v151
    %v260 = vpack.c.b16 %v230, %v228
    %v261 = vpack.c.b16 %v231, %v229
    %v262 = vpack.c.b16 %v234, %v232
    %v263 = vpack.c.b16 %v235, %v233
    %v264 = vpack.c.b16 %v238, %v236
    %v265 = vpack.c.b16 %v239, %v237
    %v266 = vpack.c.b16 %v242, %v240
    %v267 = vpack.c.b16 %v243, %v241
    %v268 = vpack.c.b16 %v246, %v244
    %v269 = vpack.c.b16 %v247, %v245
    %v270 = vpack.c.b16 %v250, %v248
    %v271 = vpack.c.b16 %v251, %v249
    %v272 = vpack.c.b16 %v254, %v252
    %v273 = vpack.c.b16 %v255, %v253
    %v274 = vpack.c.b16 %v258, %v256
    %v275 = vpack.c.b16 %v259, %v257
    %292 = vmatprep.subr.bf16.mxu0 %v261
    %293 = vmatpush1.bf16.msra.mxu0 %v260
    %294 = vmatprep.subr.bf16.mxu0 %v263
    %295 = vmatpush1.bf16.msra.mxu0 %v262
    %296 = vmatprep.subr.bf16.mxu0 %v265
    %297 = vmatpush1.bf16.msra.mxu0 %v264
    %298 = vmatprep.subr.bf16.mxu0 %v267
    %299 = vmatpush1.bf16.msra.mxu0 %v266
    %300 = vmatprep.subr.bf16.mxu0 %v269
    %301 = vmatpush1.bf16.msra.mxu0 %v268
    %302 = vmatprep.subr.bf16.mxu0 %v271
    %303 = vmatpush1.bf16.msra.mxu0 %v270
    %304 = vmatprep.subr.bf16.mxu0 %v273
    %305 = vmatpush1.bf16.msra.mxu0 %v272
    %306 = vmatprep.subr.bf16.mxu0 %v275
    %307 = vmatpush1.bf16.msra.mxu0 %v274
    %308 = vmatprep.subr.bf16.mxu0 0
    %309 = vmatpush1.bf16.msra.mxu0 0
    %310 = vmatprep.subr.bf16.mxu0 0
    %311 = vmatpush1.bf16.msra.mxu0 0
    %312 = vmatprep.subr.bf16.mxu0 0
    %313 = vmatpush1.bf16.msra.mxu0 0
    %314 = vmatprep.subr.bf16.mxu0 0
    %315 = vmatpush1.bf16.msra.mxu0 0
    %316 = vmatprep.subr.bf16.mxu0 0
    %317 = vmatpush1.bf16.msra.mxu0 0
    %318 = vmatprep.subr.bf16.mxu0 0
    %319 = vmatpush1.bf16.msra.mxu0 0
    %320 = vmatprep.subr.bf16.mxu0 0
    %321 = vmatpush1.bf16.msra.mxu0 0
    %322 = vmatprep.subr.bf16.mxu0 0
    %323 = vmatpush1.bf16.msra.mxu0 0
    %324 = vmatprep.mubr.bf16.mxu0 0
    %325 = vmatmul.mubr.bf16.gmra.mrb[0].mxu0 %v196
    %v326 = vpop.f32.mrb[0].mxu0
    %v327 = vadd.f32 %v157, %v326
    %v328 = vpop.f32.mrb[0].mxu0
    %v329 = vadd.f32 %v161, %v328
    %v330 = vpop.f32.mrb[0].mxu0
    %v331 = vadd.f32 %v157, %v330
    %v332 = vpop.f32.mrb[0].mxu0
    %v333 = vadd.f32 %v161, %v332
    %334 = vmatprep.mubr.bf16.mxu0 0
    %335 = vmatmul.mubr.bf16.gmra.mrb[0].mxu0 %v197
    %v336 = vpop.f32.mrb[0].mxu0
    %v337 = vadd.f32 %v157, %v336
    %v338 = vpop.f32.mrb[0].mxu0
    %v339 = vadd.f32 %v161, %v338
    %v340 = vpop.f32.mrb[0].mxu0
    %v341 = vadd.f32 %v157, %v340
    %v342 = vpop.f32.mrb[0].mxu0
    %v343 = vadd.f32 %v161, %v342
    %344 = vmatprep.mubr.bf16.mxu0 0
    %345 = vmatmul.mubr.bf16.gmra.mrb[0].mxu0 %v198
    %v346 = vpop.f32.mrb[0].mxu0
    %v347 = vadd.f32 %v157, %v346
    %v348 = vpop.f32.mrb[0].mxu0
    %v349 = vadd.f32 %v161, %v348
    %v350 = vpop.f32.mrb[0].mxu0
    %v351 = vadd.f32 %v157, %v350
    %v352 = vpop.f32.mrb[0].mxu0
    %v353 = vadd.f32 %v161, %v352
    %354 = vmatprep.mubr.bf16.mxu0 0
    %355 = vmatmul.mubr.bf16.gmra.mrb[0].mxu0 %v199
    %v356 = vpop.f32.mrb[0].mxu0
    %v357 = vadd.f32 %v157, %v356
    %v358 = vpop.f32.mrb[0].mxu0
    %v359 = vadd.f32 %v161, %v358
    %v360 = vpop.f32.mrb[0].mxu0
    %v361 = vadd.f32 %v157, %v360
    %v362 = vpop.f32.mrb[0].mxu0
    %v363 = vadd.f32 %v161, %v362
    %364 = vmatprep.mubr.bf16.mxu0 0
    %365 = vmatmul.mubr.bf16.gmra.mrb[0].mxu0 %v200
    %v366 = vpop.f32.mrb[0].mxu0
    %v367 = vadd.f32 %v157, %v366
    %v368 = vpop.f32.mrb[0].mxu0
    %v369 = vadd.f32 %v161, %v368
    %v370 = vpop.f32.mrb[0].mxu0
    %v371 = vadd.f32 %v157, %v370
    %v372 = vpop.f32.mrb[0].mxu0
    %v373 = vadd.f32 %v161, %v372
    %374 = vmatprep.mubr.bf16.mxu0 0
    %375 = vmatmul.mubr.bf16.gmra.mrb[0].mxu0 %v201
    %v376 = vpop.f32.mrb[0].mxu0
    %v377 = vadd.f32 %v157, %v376
    %v378 = vpop.f32.mrb[0].mxu0
    %v379 = vadd.f32 %v161, %v378
    %v380 = vpop.f32.mrb[0].mxu0
    %v381 = vadd.f32 %v157, %v380
    %v382 = vpop.f32.mrb[0].mxu0
    %v383 = vadd.f32 %v161, %v382
    %384 = vmatprep.mubr.bf16.mxu0 0
    %385 = vmatmul.mubr.bf16.gmra.mrb[0].mxu0 %v202
    %v386 = vpop.f32.mrb[0].mxu0
    %v387 = vadd.f32 %v157, %v386
    %v388 = vpop.f32.mrb[0].mxu0
    %v389 = vadd.f32 %v161, %v388
    %v390 = vpop.f32.mrb[0].mxu0
    %v391 = vadd.f32 %v157, %v390
    %v392 = vpop.f32.mrb[0].mxu0
    %v393 = vadd.f32 %v161, %v392
    %394 = vmatprep.mubr.bf16.mxu0 0
    %395 = vmatmul.mubr.bf16.gmra.mrb[0].mxu0 %v203
    %v396 = vpop.f32.mrb[0].mxu0
    %v397 = vadd.f32 %v157, %v396
    %v398 = vpop.f32.mrb[0].mxu0
    %v399 = vadd.f32 %v161, %v398
    %v400 = vpop.f32.mrb[0].mxu0
    %v401 = vadd.f32 %v157, %v400
    %v402 = vpop.f32.mrb[0].mxu0
    %v403 = vadd.f32 %v161, %v402
    %404 = vdwg.mxu0
    %v405 = vxor.u32 %v327, 2147483648
    %v406 = vxor.u32 %v331, 2147483648
    %v407 = vxor.u32 %v337, 2147483648
    %v408 = vxor.u32 %v341, 2147483648
    %v409 = vxor.u32 %v347, 2147483648
    %v410 = vxor.u32 %v351, 2147483648
    %v411 = vxor.u32 %v357, 2147483648
    %v412 = vxor.u32 %v361, 2147483648
    %v413 = vxor.u32 %v367, 2147483648
    %v414 = vxor.u32 %v371, 2147483648
    %v415 = vxor.u32 %v377, 2147483648
    %v416 = vxor.u32 %v381, 2147483648
    %v417 = vxor.u32 %v387, 2147483648
    %v418 = vxor.u32 %v391, 2147483648
    %v419 = vxor.u32 %v397, 2147483648
    %v420 = vxor.u32 %v401, 2147483648
    %v421 = vmul.f32 %v405, 1.442695
    %v422 = vpow.pop %v421
    %v423 = vmul.f32 %v406, 1.442695
    %v424 = vpow.pop %v423
    %v425 = vmul.f32 %v407, 1.442695
    %v426 = vpow.pop %v425
    %v427 = vmul.f32 %v408, 1.442695
    %v428 = vpow.pop %v427
    %v429 = vmul.f32 %v409, 1.442695
    %v430 = vpow.pop %v429
    %v431 = vmul.f32 %v410, 1.442695
    %v432 = vpow.pop %v431
    %v433 = vmul.f32 %v411, 1.442695
    %v434 = vpow.pop %v433
    %v435 = vmul.f32 %v412, 1.442695
    %v436 = vpow.pop %v435
    %v437 = vmul.f32 %v413, 1.442695
    %v438 = vpow.pop %v437
    %v439 = vmul.f32 %v414, 1.442695
    %v440 = vpow.pop %v439
    %v441 = vmul.f32 %v415, 1.442695
    %v442 = vpow.pop %v441
    %v443 = vmul.f32 %v416, 1.442695
    %v444 = vpow.pop %v443
    %v445 = vmul.f32 %v417, 1.442695
    %v446 = vpow.pop %v445
    %v447 = vmul.f32 %v418, 1.442695
    %v448 = vpow.pop %v447
    %v449 = vmul.f32 %v419, 1.442695
    %v450 = vpow.pop %v449
    %v451 = vmul.f32 %v420, 1.442695
    %v452 = vpow.pop %v451
    %v453 = vadd.f32 %v422, 1.0
    %v454 = vadd.f32 %v424, 1.0
    %v455 = vadd.f32 %v426, 1.0
    %v456 = vadd.f32 %v428, 1.0
    %v457 = vadd.f32 %v430, 1.0
    %v458 = vadd.f32 %v432, 1.0
    %v459 = vadd.f32 %v434, 1.0
    %v460 = vadd.f32 %v436, 1.0
    %v461 = vadd.f32 %v438, 1.0
    %v462 = vadd.f32 %v440, 1.0
    %v463 = vadd.f32 %v442, 1.0
    %v464 = vadd.f32 %v444, 1.0
    %v465 = vadd.f32 %v446, 1.0
    %v466 = vadd.f32 %v448, 1.0
    %v467 = vadd.f32 %v450, 1.0
    %v468 = vadd.f32 %v452, 1.0
    %v469 = vrcp.pop %v453
    %v470 = vmul.f32 1.0, %v469
    %v471 = vrcp.pop %v454
    %v472 = vmul.f32 1.0, %v471
    %v473 = vrcp.pop %v455
    %v474 = vmul.f32 1.0, %v473
    %v475 = vrcp.pop %v456
    %v476 = vmul.f32 1.0, %v475
    %v477 = vrcp.pop %v457
    %v478 = vmul.f32 1.0, %v477
    %v479 = vrcp.pop %v458
    %v480 = vmul.f32 1.0, %v479
    %v481 = vrcp.pop %v459
    %v482 = vmul.f32 1.0, %v481
    %v483 = vrcp.pop %v460
    %v484 = vmul.f32 1.0, %v483
    %v485 = vrcp.pop %v461
    %v486 = vmul.f32 1.0, %v485
    %v487 = vrcp.pop %v462
    %v488 = vmul.f32 1.0, %v487
    %v489 = vrcp.pop %v463
    %v490 = vmul.f32 1.0, %v489
    %v491 = vrcp.pop %v464
    %v492 = vmul.f32 1.0, %v491
    %v493 = vrcp.pop %v465
    %v494 = vmul.f32 1.0, %v493
    %v495 = vrcp.pop %v466
    %v496 = vmul.f32 1.0, %v495
    %v497 = vrcp.pop %v467
    %v498 = vmul.f32 1.0, %v497
    %v499 = vrcp.pop %v468
    %v500 = vmul.f32 1.0, %v499
    %v501 = vmul.f32 %v327, %v470
    %v502 = vmul.f32 %v331, %v472
    %v503 = vmul.f32 %v337, %v474
    %v504 = vmul.f32 %v341, %v476
    %v505 = vmul.f32 %v347, %v478
    %v506 = vmul.f32 %v351, %v480
    %v507 = vmul.f32 %v357, %v482
    %v508 = vmul.f32 %v361, %v484
    %v509 = vmul.f32 %v367, %v486
    %v510 = vmul.f32 %v371, %v488
    %v511 = vmul.f32 %v377, %v490
    %v512 = vmul.f32 %v381, %v492
    %v513 = vmul.f32 %v387, %v494
    %v514 = vmul.f32 %v391, %v496
    %v515 = vmul.f32 %v397, %v498
    %v516 = vmul.f32 %v401, %v500
    %v517 = vmul.f32 %v501, %v329
    %v518 = vmul.f32 %v502, %v333
    %v519 = vmul.f32 %v503, %v339
    %v520 = vmul.f32 %v504, %v343
    %v521 = vmul.f32 %v505, %v349
    %v522 = vmul.f32 %v506, %v353
    %v523 = vmul.f32 %v507, %v359
    %v524 = vmul.f32 %v508, %v363
    %v525 = vmul.f32 %v509, %v369
    %v526 = vmul.f32 %v510, %v373
    %v527 = vmul.f32 %v511, %v379
    %v528 = vmul.f32 %v512, %v383
    %v529 = vmul.f32 %v513, %v389
    %v530 = vmul.f32 %v514, %v393
    %v531 = vmul.f32 %v515, %v399
    %v532 = vmul.f32 %v516, %v403
    %v533 = vpack.c.bf16 %v518, %v517
    %v534 = vpack.c.bf16 %v520, %v519
    %v535 = vpack.c.bf16 %v522, %v521
    %v536 = vpack.c.bf16 %v524, %v523
    %v537 = vpack.c.bf16 %v526, %v525
    %v538 = vpack.c.bf16 %v528, %v527
    %v539 = vpack.c.bf16 %v530, %v529
    %v540 = vpack.c.bf16 %v532, %v531
    %v541 = vld [vmem:[#allocation8] sm:$0xf]
    %v542 = vld [vmem:[#allocation8 + $0x4] sm:$0xf]
    %v543 = vld [vmem:[#allocation8 + $0x8] sm:$0xf]
    %v544 = vld [vmem:[#allocation8 + $0xc] sm:$0xf]
    %v545 = vld [vmem:[#allocation8 + $0x10] sm:$0xf]
    %v546 = vld [vmem:[#allocation8 + $0x14] sm:$0xf]
    %v547 = vld [vmem:[#allocation8 + $0x18] sm:$0xf]
    %v548 = vld [vmem:[#allocation8 + $0x1c] sm:$0xf]
    %v549 = vld [vmem:[#allocation8 + $0x20] sm:$0xf]
    %v550 = vld [vmem:[#allocation8 + $0x24] sm:$0xf]
    %v551 = vld [vmem:[#allocation8 + $0x28] sm:$0xf]
    %v552 = vld [vmem:[#allocation8 + $0x2c] sm:$0xf]
    %v553 = vld [vmem:[#allocation8 + $0x30] sm:$0xf]
    %v554 = vld [vmem:[#allocation8 + $0x34] sm:$0xf]
    %v555 = vld [vmem:[#allocation8 + $0x38] sm:$0xf]
    %v556 = vld [vmem:[#allocation8 + $0x3c] sm:$0xf]
    %v557 = vld [vmem:[%s5] sm:$0x1]
    %v559 = vlaneseq
    %v560 = vshrl.u32 %v559, 7
    %v561 = vsub.s32 0, %v560
    %v562 = vrot.slane %v557, %v561
    %v580 = vunpack.c.l.b16 %v541
    %v581 = vunpack.c.l.b16 %v542
    %v582 = vunpack.c.l.b16 %v543
    %v583 = vunpack.c.l.b16 %v544
    %v584 = vunpack.c.l.b16 %v545
    %v585 = vunpack.c.l.b16 %v546
    %v586 = vunpack.c.l.b16 %v547
    %v587 = vunpack.c.l.b16 %v548
    %v588 = vunpack.c.l.b16 %v549
    %v589 = vunpack.c.l.b16 %v550
    %v590 = vunpack.c.l.b16 %v551
    %v591 = vunpack.c.l.b16 %v552
    %v592 = vunpack.c.l.b16 %v553
    %v593 = vunpack.c.l.b16 %v554
    %v594 = vunpack.c.l.b16 %v555
    %v595 = vunpack.c.l.b16 %v556
    %v596 = vpack.c.b16 %v581, %v580
    %v597 = vpack.c.b16 %v583, %v582
    %v598 = vpack.c.b16 %v585, %v584
    %v599 = vpack.c.b16 %v587, %v586
    %v600 = vpack.c.b16 %v589, %v588
    %v601 = vpack.c.b16 %v591, %v590
    %v602 = vpack.c.b16 %v593, %v592
    %v603 = vpack.c.b16 %v595, %v594
    %612 = vmatprep.subr.bf16.mxu0 0
    %613 = vmatpush1.bf16.msra.mxu0 %v596
    %614 = vmatprep.subr.bf16.mxu0 0
    %615 = vmatpush1.bf16.msra.mxu0 %v597
    %616 = vmatprep.subr.bf16.mxu0 0
    %617 = vmatpush1.bf16.msra.mxu0 %v598
    %618 = vmatprep.subr.bf16.mxu0 0
    %619 = vmatpush1.bf16.msra.mxu0 %v599
    %620 = vmatprep.subr.bf16.mxu0 0
    %621 = vmatpush1.bf16.msra.mxu0 %v600
    %622 = vmatprep.subr.bf16.mxu0 0
    %623 = vmatpush1.bf16.msra.mxu0 %v601
    %624 = vmatprep.subr.bf16.mxu0 0
    %625 = vmatpush1.bf16.msra.mxu0 %v602
    %626 = vmatprep.subr.bf16.mxu0 0
    %627 = vmatpush1.bf16.msra.mxu0 %v603
    %628 = vmatprep.subr.bf16.mxu0 0
    %629 = vmatpush1.bf16.msra.mxu0 0
    %630 = vmatprep.subr.bf16.mxu0 0
    %631 = vmatpush1.bf16.msra.mxu0 0
    %632 = vmatprep.subr.bf16.mxu0 0
    %633 = vmatpush1.bf16.msra.mxu0 0
    %634 = vmatprep.subr.bf16.mxu0 0
    %635 = vmatpush1.bf16.msra.mxu0 0
    %636 = vmatprep.subr.bf16.mxu0 0
    %637 = vmatpush1.bf16.msra.mxu0 0
    %638 = vmatprep.subr.bf16.mxu0 0
    %639 = vmatpush1.bf16.msra.mxu0 0
    %640 = vmatprep.subr.bf16.mxu0 0
    %641 = vmatpush1.bf16.msra.mxu0 0
    %642 = vmatprep.subr.bf16.mxu0 0
    %643 = vmatpush1.bf16.msra.mxu0 0
    %644 = vmatprep.mubr.bf16.mxu0 0
    %645 = vmatmul.mubr.bf16.gmra.mrb[0].mxu0 %v533
    %v646 = vpop.f32.mrb[0].mxu0
    %v647 = vadd.f32 %v562, %v646
    %v648 = vpop.f32.mrb[0].mxu0
    %v649 = vpop.f32.mrb[0].mxu0
    %v650 = vadd.f32 %v562, %v649
    %v651 = vpop.f32.mrb[0].mxu0
    %652 = vmatprep.mubr.bf16.mxu0 0
    %653 = vmatmul.mubr.bf16.gmra.mrb[0].mxu0 %v534
    %v654 = vpop.f32.mrb[0].mxu0
    %v655 = vadd.f32 %v562, %v654
    %v656 = vpop.f32.mrb[0].mxu0
    %v657 = vpop.f32.mrb[0].mxu0
    %v658 = vadd.f32 %v562, %v657
    %v659 = vpop.f32.mrb[0].mxu0
    %660 = vmatprep.mubr.bf16.mxu0 0
    %661 = vmatmul.mubr.bf16.gmra.mrb[0].mxu0 %v535
    %v662 = vpop.f32.mrb[0].mxu0
    %v663 = vadd.f32 %v562, %v662
    %v664 = vpop.f32.mrb[0].mxu0
    %v665 = vpop.f32.mrb[0].mxu0
    %v666 = vadd.f32 %v562, %v665
    %v667 = vpop.f32.mrb[0].mxu0
    %668 = vmatprep.mubr.bf16.mxu0 0
    %669 = vmatmul.mubr.bf16.gmra.mrb[0].mxu0 %v536
    %v670 = vpop.f32.mrb[0].mxu0
    %v671 = vadd.f32 %v562, %v670
    %v672 = vpop.f32.mrb[0].mxu0
    %v673 = vpop.f32.mrb[0].mxu0
    %v674 = vadd.f32 %v562, %v673
    %v675 = vpop.f32.mrb[0].mxu0
    %676 = vmatprep.mubr.bf16.mxu0 0
    %677 = vmatmul.mubr.bf16.gmra.mrb[0].mxu0 %v537
    %v678 = vpop.f32.mrb[0].mxu0
    %v679 = vadd.f32 %v562, %v678
    %v680 = vpop.f32.mrb[0].mxu0
    %v681 = vpop.f32.mrb[0].mxu0
    %v682 = vadd.f32 %v562, %v681
    %v683 = vpop.f32.mrb[0].mxu0
    %684 = vmatprep.mubr.bf16.mxu0 0
    %685 = vmatmul.mubr.bf16.gmra.mrb[0].mxu0 %v538
    %v686 = vpop.f32.mrb[0].mxu0
    %v687 = vadd.f32 %v562, %v686
    %v688 = vpop.f32.mrb[0].mxu0
    %v689 = vpop.f32.mrb[0].mxu0
    %v690 = vadd.f32 %v562, %v689
    %v691 = vpop.f32.mrb[0].mxu0
    %692 = vmatprep.mubr.bf16.mxu0 0
    %693 = vmatmul.mubr.bf16.gmra.mrb[0].mxu0 %v539
    %v694 = vpop.f32.mrb[0].mxu0
    %v695 = vadd.f32 %v562, %v694
    %v696 = vpop.f32.mrb[0].mxu0
    %v697 = vpop.f32.mrb[0].mxu0
    %v698 = vadd.f32 %v562, %v697
    %v699 = vpop.f32.mrb[0].mxu0
    %700 = vmatprep.mubr.bf16.mxu0 0
    %701 = vmatmul.mubr.bf16.gmra.mrb[0].mxu0 %v540
    %v702 = vpop.f32.mrb[0].mxu0
    %v703 = vadd.f32 %v562, %v702
    %v704 = vpop.f32.mrb[0].mxu0
    %v705 = vpop.f32.mrb[0].mxu0
    %v706 = vadd.f32 %v562, %v705
    %v707 = vpop.f32.mrb[0].mxu0
    %708 = vdwg.mxu0
    %v709 = vld [vmem:[#allocation5] sm:$0xf]
    %v710 = vld [vmem:[#allocation5 + $0x4] sm:$0xf]
    %v711 = vld [vmem:[#allocation5 + $0x8] sm:$0xf]
    %v712 = vld [vmem:[#allocation5 + $0xc] sm:$0xf]
    %v713 = vld [vmem:[#allocation5 + $0x10] sm:$0xf]
    %v714 = vld [vmem:[#allocation5 + $0x14] sm:$0xf]
    %v715 = vld [vmem:[#allocation5 + $0x18] sm:$0xf]
    %v716 = vld [vmem:[#allocation5 + $0x1c] sm:$0xf]
    %v717 = vld [vmem:[#allocation5 + $0x20] sm:$0xf]
    %v718 = vld [vmem:[#allocation5 + $0x24] sm:$0xf]
    %v719 = vld [vmem:[#allocation5 + $0x28] sm:$0xf]
    %v720 = vld [vmem:[#allocation5 + $0x2c] sm:$0xf]
    %v721 = vld [vmem:[#allocation5 + $0x30] sm:$0xf]
    %v722 = vld [vmem:[#allocation5 + $0x34] sm:$0xf]
    %v723 = vld [vmem:[#allocation5 + $0x38] sm:$0xf]
    %v724 = vld [vmem:[#allocation5 + $0x3c] sm:$0xf]
    %v725 = vld [vmem:[#allocation10] sm:$0xff]
    %v726 = vld [vmem:[#allocation10 + $0x8] sm:$0xff]
    %v727 = vld [vmem:[#allocation10 + $0x10] sm:$0xff]
    %v728 = vld [vmem:[#allocation10 + $0x18] sm:$0xff]
    %v729 = vld [vmem:[#allocation10 + $0x20] sm:$0xff]
    %v730 = vld [vmem:[#allocation10 + $0x28] sm:$0xff]
    %v731 = vld [vmem:[#allocation10 + $0x30] sm:$0xff]
    %v732 = vld [vmem:[#allocation10 + $0x38] sm:$0xff]
    %v733 = vld [vmem:[#allocation10 + $0x40] sm:$0xff]
    %v734 = vld [vmem:[#allocation10 + $0x48] sm:$0xff]
    %v735 = vld [vmem:[#allocation10 + $0x50] sm:$0xff]
    %v736 = vld [vmem:[#allocation10 + $0x58] sm:$0xff]
    %v737 = vld [vmem:[#allocation10 + $0x60] sm:$0xff]
    %v738 = vld [vmem:[#allocation10 + $0x68] sm:$0xff]
    %v739 = vld [vmem:[#allocation10 + $0x70] sm:$0xff]
    %v740 = vld [vmem:[#allocation10 + $0x78] sm:$0xff]
    %v741 = vld [vmem:[%s7] sm:$0x3]
    %v743 = vlaneseq
    %v744 = vshrl.u32 %v743, 7
    %v745 = vsub.s32 0, %v744
    %v746 = vrot.slane %v741, %v745
    %v747 = vlaneseq
    %v748 = vshrl.u32 %v747, 7
    %v749 = vsub.s32 1, %v748
    %v750 = vrot.slane %v741, %v749
    %v769 = vunpack.c.l.b16 %v709
    %v770 = vunpack.c.l.b16 %v710
    %v771 = vunpack.c.l.b16 %v711
    %v772 = vunpack.c.l.b16 %v712
    %v773 = vunpack.c.l.b16 %v713
    %v774 = vunpack.c.l.b16 %v714
    %v775 = vunpack.c.l.b16 %v715
    %v776 = vunpack.c.l.b16 %v716
    %v777 = vunpack.c.l.b16 %v717
    %v778 = vunpack.c.l.b16 %v718
    %v779 = vunpack.c.l.b16 %v719
    %v780 = vunpack.c.l.b16 %v720
    %v781 = vunpack.c.l.b16 %v721
    %v782 = vunpack.c.l.b16 %v722
    %v783 = vunpack.c.l.b16 %v723
    %v784 = vunpack.c.l.b16 %v724
    %v785 = vpack.c.b16 %v770, %v769
    %v786 = vpack.c.b16 %v772, %v771
    %v787 = vpack.c.b16 %v774, %v773
    %v788 = vpack.c.b16 %v776, %v775
    %v789 = vpack.c.b16 %v778, %v777
    %v790 = vpack.c.b16 %v780, %v779
    %v791 = vpack.c.b16 %v782, %v781
    %v792 = vpack.c.b16 %v784, %v783
    %v817 = vunpack.c.l.b16 %v725
    %v818 = vunpack.c.h.b16 %v725
    %v819 = vunpack.c.l.b16 %v726
    %v820 = vunpack.c.h.b16 %v726
    %v821 = vunpack.c.l.b16 %v727
    %v822 = vunpack.c.h.b16 %v727
    %v823 = vunpack.c.l.b16 %v728
    %v824 = vunpack.c.h.b16 %v728
    %v825 = vunpack.c.l.b16 %v729
    %v826 = vunpack.c.h.b16 %v729
    %v827 = vunpack.c.l.b16 %v730
    %v828 = vunpack.c.h.b16 %v730
    %v829 = vunpack.c.l.b16 %v731
    %v830 = vunpack.c.h.b16 %v731
    %v831 = vunpack.c.l.b16 %v732
    %v832 = vunpack.c.h.b16 %v732
    %v833 = vunpack.c.l.b16 %v733
    %v834 = vunpack.c.h.b16 %v733
    %v835 = vunpack.c.l.b16 %v734
    %v836 = vunpack.c.h.b16 %v734
    %v837 = vunpack.c.l.b16 %v735
    %v838 = vunpack.c.h.b16 %v735
    %v839 = vunpack.c.l.b16 %v736
    %v840 = vunpack.c.h.b16 %v736
    %v841 = vunpack.c.l.b16 %v737
    %v842 = vunpack.c.h.b16 %v737
    %v843 = vunpack.c.l.b16 %v738
    %v844 = vunpack.c.h.b16 %v738
    %v845 = vunpack.c.l.b16 %v739
    %v846 = vunpack.c.h.b16 %v739
    %v847 = vunpack.c.l.b16 %v740
    %v848 = vunpack.c.h.b16 %v740
    %v849 = vpack.c.b16 %v819, %v817
    %v850 = vpack.c.b16 %v820, %v818
    %v851 = vpack.c.b16 %v823, %v821
    %v852 = vpack.c.b16 %v824, %v822
    %v853 = vpack.c.b16 %v827, %v825
    %v854 = vpack.c.b16 %v828, %v826
    %v855 = vpack.c.b16 %v831, %v829
    %v856 = vpack.c.b16 %v832, %v830
    %v857 = vpack.c.b16 %v835, %v833
    %v858 = vpack.c.b16 %v836, %v834
    %v859 = vpack.c.b16 %v839, %v837
    %v860 = vpack.c.b16 %v840, %v838
    %v861 = vpack.c.b16 %v843, %v841
    %v862 = vpack.c.b16 %v844, %v842
    %v863 = vpack.c.b16 %v847, %v845
    %v864 = vpack.c.b16 %v848, %v846
    %881 = vmatprep.subr.bf16.mxu0 %v850
    %882 = vmatpush1.bf16.msra.mxu0 %v849
    %883 = vmatprep.subr.bf16.mxu0 %v852
    %884 = vmatpush1.bf16.msra.mxu0 %v851
    %885 = vmatprep.subr.bf16.mxu0 %v854
    %886 = vmatpush1.bf16.msra.mxu0 %v853
    %887 = vmatprep.subr.bf16.mxu0 %v856
    %888 = vmatpush1.bf16.msra.mxu0 %v855
    %889 = vmatprep.subr.bf16.mxu0 %v858
    %890 = vmatpush1.bf16.msra.mxu0 %v857
    %891 = vmatprep.subr.bf16.mxu0 %v860
    %892 = vmatpush1.bf16.msra.mxu0 %v859
    %893 = vmatprep.subr.bf16.mxu0 %v862
    %894 = vmatpush1.bf16.msra.mxu0 %v861
    %895 = vmatprep.subr.bf16.mxu0 %v864
    %896 = vmatpush1.bf16.msra.mxu0 %v863
    %897 = vmatprep.subr.bf16.mxu0 0
    %898 = vmatpush1.bf16.msra.mxu0 0
    %899 = vmatprep.subr.bf16.mxu0 0
    %900 = vmatpush1.bf16.msra.mxu0 0
    %901 = vmatprep.subr.bf16.mxu0 0
    %902 = vmatpush1.bf16.msra.mxu0 0
    %903 = vmatprep.subr.bf16.mxu0 0
    %904 = vmatpush1.bf16.msra.mxu0 0
    %905 = vmatprep.subr.bf16.mxu0 0
    %906 = vmatpush1.bf16.msra.mxu0 0
    %907 = vmatprep.subr.bf16.mxu0 0
    %908 = vmatpush1.bf16.msra.mxu0 0
    %909 = vmatprep.subr.bf16.mxu0 0
    %910 = vmatpush1.bf16.msra.mxu0 0
    %911 = vmatprep.subr.bf16.mxu0 0
    %912 = vmatpush1.bf16.msra.mxu0 0
    %913 = vmatprep.mubr.bf16.mxu0 0
    %914 = vmatmul.mubr.bf16.gmra.mrb[0].mxu0 %v785
    %v915 = vpop.f32.mrb[0].mxu0
    %v916 = vadd.f32 %v746, %v915
    %v917 = vpop.f32.mrb[0].mxu0
    %v918 = vadd.f32 %v750, %v917
    %v919 = vpop.f32.mrb[0].mxu0
    %v920 = vadd.f32 %v746, %v919
    %v921 = vpop.f32.mrb[0].mxu0
    %v922 = vadd.f32 %v750, %v921
    %923 = vmatprep.mubr.bf16.mxu0 0
    %924 = vmatmul.mubr.bf16.gmra.mrb[0].mxu0 %v786
    %v925 = vpop.f32.mrb[0].mxu0
    %v926 = vadd.f32 %v746, %v925
    %v927 = vpop.f32.mrb[0].mxu0
    %v928 = vadd.f32 %v750, %v927
    %v929 = vpop.f32.mrb[0].mxu0
    %v930 = vadd.f32 %v746, %v929
    %v931 = vpop.f32.mrb[0].mxu0
    %v932 = vadd.f32 %v750, %v931
    %933 = vmatprep.mubr.bf16.mxu0 0
    %934 = vmatmul.mubr.bf16.gmra.mrb[0].mxu0 %v787
    %v935 = vpop.f32.mrb[0].mxu0
    %v936 = vadd.f32 %v746, %v935
    %v937 = vpop.f32.mrb[0].mxu0
    %v938 = vadd.f32 %v750, %v937
    %v939 = vpop.f32.mrb[0].mxu0
    %v940 = vadd.f32 %v746, %v939
    %v941 = vpop.f32.mrb[0].mxu0
    %v942 = vadd.f32 %v750, %v941
    %943 = vmatprep.mubr.bf16.mxu0 0
    %944 = vmatmul.mubr.bf16.gmra.mrb[0].mxu0 %v788
    %v945 = vpop.f32.mrb[0].mxu0
    %v946 = vadd.f32 %v746, %v945
    %v947 = vpop.f32.mrb[0].mxu0
    %v948 = vadd.f32 %v750, %v947
    %v949 = vpop.f32.mrb[0].mxu0
    %v950 = vadd.f32 %v746, %v949
    %v951 = vpop.f32.mrb[0].mxu0
    %v952 = vadd.f32 %v750, %v951
    %953 = vmatprep.mubr.bf16.mxu0 0
    %954 = vmatmul.mubr.bf16.gmra.mrb[0].mxu0 %v789
    %v955 = vpop.f32.mrb[0].mxu0
    %v956 = vadd.f32 %v746, %v955
    %v957 = vpop.f32.mrb[0].mxu0
    %v958 = vadd.f32 %v750, %v957
    %v959 = vpop.f32.mrb[0].mxu0
    %v960 = vadd.f32 %v746, %v959
    %v961 = vpop.f32.mrb[0].mxu0
    %v962 = vadd.f32 %v750, %v961
    %963 = vmatprep.mubr.bf16.mxu0 0
    %964 = vmatmul.mubr.bf16.gmra.mrb[0].mxu0 %v790
    %v965 = vpop.f32.mrb[0].mxu0
    %v966 = vadd.f32 %v746, %v965
    %v967 = vpop.f32.mrb[0].mxu0
    %v968 = vadd.f32 %v750, %v967
    %v969 = vpop.f32.mrb[0].mxu0
    %v970 = vadd.f32 %v746, %v969
    %v971 = vpop.f32.mrb[0].mxu0
    %v972 = vadd.f32 %v750, %v971
    %973 = vmatprep.mubr.bf16.mxu0 0
    %974 = vmatmul.mubr.bf16.gmra.mrb[0].mxu0 %v791
    %v975 = vpop.f32.mrb[0].mxu0
    %v976 = vadd.f32 %v746, %v975
    %v977 = vpop.f32.mrb[0].mxu0
    %v978 = vadd.f32 %v750, %v977
    %v979 = vpop.f32.mrb[0].mxu0
    %v980 = vadd.f32 %v746, %v979
    %v981 = vpop.f32.mrb[0].mxu0
    %v982 = vadd.f32 %v750, %v981
    %983 = vmatprep.mubr.bf16.mxu0 0
    %984 = vmatmul.mubr.bf16.gmra.mrb[0].mxu0 %v792
    %v985 = vpop.f32.mrb[0].mxu0
    %v986 = vadd.f32 %v746, %v985
    %v987 = vpop.f32.mrb[0].mxu0
    %v988 = vadd.f32 %v750, %v987
    %v989 = vpop.f32.mrb[0].mxu0
    %v990 = vadd.f32 %v746, %v989
    %v991 = vpop.f32.mrb[0].mxu0
    %v992 = vadd.f32 %v750, %v991
    %993 = vdwg.mxu0
    %v994 = vxor.u32 %v916, 2147483648
    %v995 = vxor.u32 %v920, 2147483648
    %v996 = vxor.u32 %v926, 2147483648
    %v997 = vxor.u32 %v930, 2147483648
    %v998 = vxor.u32 %v936, 2147483648
    %v999 = vxor.u32 %v940, 2147483648
    %v1000 = vxor.u32 %v946, 2147483648
    %v1001 = vxor.u32 %v950, 2147483648
    %v1002 = vxor.u32 %v956, 2147483648
    %v1003 = vxor.u32 %v960, 2147483648
    %v1004 = vxor.u32 %v966, 2147483648
    %v1005 = vxor.u32 %v970, 2147483648
    %v1006 = vxor.u32 %v976, 2147483648
    %v1007 = vxor.u32 %v980, 2147483648
    %v1008 = vxor.u32 %v986, 2147483648
    %v1009 = vxor.u32 %v990, 2147483648
    %v1010 = vmul.f32 %v994, 1.442695
    %v1011 = vpow.pop %v1010
    %v1012 = vmul.f32 %v995, 1.442695
    %v1013 = vpow.pop %v1012
    %v1014 = vmul.f32 %v996, 1.442695
    %v1015 = vpow.pop %v1014
    %v1016 = vmul.f32 %v997, 1.442695
    %v1017 = vpow.pop %v1016
    %v1018 = vmul.f32 %v998, 1.442695
    %v1019 = vpow.pop %v1018
    %v1020 = vmul.f32 %v999, 1.442695
    %v1021 = vpow.pop %v1020
    %v1022 = vmul.f32 %v1000, 1.442695
    %v1023 = vpow.pop %v1022
    %v1024 = vmul.f32 %v1001, 1.442695
    %v1025 = vpow.pop %v1024
    %v1026 = vmul.f32 %v1002, 1.442695
    %v1027 = vpow.pop %v1026
    %v1028 = vmul.f32 %v1003, 1.442695
    %v1029 = vpow.pop %v1028
    %v1030 = vmul.f32 %v1004, 1.442695
    %v1031 = vpow.pop %v1030
    %v1032 = vmul.f32 %v1005, 1.442695
    %v1033 = vpow.pop %v1032
    %v1034 = vmul.f32 %v1006, 1.442695
    %v1035 = vpow.pop %v1034
    %v1036 = vmul.f32 %v1007, 1.442695
    %v1037 = vpow.pop %v1036
    %v1038 = vmul.f32 %v1008, 1.442695
    %v1039 = vpow.pop %v1038
    %v1040 = vmul.f32 %v1009, 1.442695
    %v1041 = vpow.pop %v1040
    %v1042 = vadd.f32 %v1011, 1.0
    %v1043 = vadd.f32 %v1013, 1.0
    %v1044 = vadd.f32 %v1015, 1.0
    %v1045 = vadd.f32 %v1017, 1.0
    %v1046 = vadd.f32 %v1019, 1.0
    %v1047 = vadd.f32 %v1021, 1.0
    %v1048 = vadd.f32 %v1023, 1.0
    %v1049 = vadd.f32 %v1025, 1.0
    %v1050 = vadd.f32 %v1027, 1.0
    %v1051 = vadd.f32 %v1029, 1.0
    %v1052 = vadd.f32 %v1031, 1.0
    %v1053 = vadd.f32 %v1033, 1.0
    %v1054 = vadd.f32 %v1035, 1.0
    %v1055 = vadd.f32 %v1037, 1.0
    %v1056 = vadd.f32 %v1039, 1.0
    %v1057 = vadd.f32 %v1041, 1.0
    %v1058 = vrcp.pop %v1042
    %v1059 = vmul.f32 1.0, %v1058
    %v1060 = vrcp.pop %v1043
    %v1061 = vmul.f32 1.0, %v1060
    %v1062 = vrcp.pop %v1044
    %v1063 = vmul.f32 1.0, %v1062
    %v1064 = vrcp.pop %v1045
    %v1065 = vmul.f32 1.0, %v1064
    %v1066 = vrcp.pop %v1046
    %v1067 = vmul.f32 1.0, %v1066
    %v1068 = vrcp.pop %v1047
    %v1069 = vmul.f32 1.0, %v1068
    %v1070 = vrcp.pop %v1048
    %v1071 = vmul.f32 1.0, %v1070
    %v1072 = vrcp.pop %v1049
    %v1073 = vmul.f32 1.0, %v1072
    %v1074 = vrcp.pop %v1050
    %v1075 = vmul.f32 1.0, %v1074
    %v1076 = vrcp.pop %v1051
    %v1077 = vmul.f32 1.0, %v1076
    %v1078 = vrcp.pop %v1052
    %v1079 = vmul.f32 1.0, %v1078
    %v1080 = vrcp.pop %v1053
    %v1081 = vmul.f32 1.0, %v1080
    %v1082 = vrcp.pop %v1054
    %v1083 = vmul.f32 1.0, %v1082
    %v1084 = vrcp.pop %v1055
    %v1085 = vmul.f32 1.0, %v1084
    %v1086 = vrcp.pop %v1056
    %v1087 = vmul.f32 1.0, %v1086
    %v1088 = vrcp.pop %v1057
    %v1089 = vmul.f32 1.0, %v1088
    %v1090 = vmul.f32 %v916, %v1059
    %v1091 = vmul.f32 %v920, %v1061
    %v1092 = vmul.f32 %v926, %v1063
    %v1093 = vmul.f32 %v930, %v1065
    %v1094 = vmul.f32 %v936, %v1067
    %v1095 = vmul.f32 %v940, %v1069
    %v1096 = vmul.f32 %v946, %v1071
    %v1097 = vmul.f32 %v950, %v1073
    %v1098 = vmul.f32 %v956, %v1075
    %v1099 = vmul.f32 %v960, %v1077
    %v1100 = vmul.f32 %v966, %v1079
    %v1101 = vmul.f32 %v970, %v1081
    %v1102 = vmul.f32 %v976, %v1083
    %v1103 = vmul.f32 %v980, %v1085
    %v1104 = vmul.f32 %v986, %v1087
    %v1105 = vmul.f32 %v990, %v1089
    %v1106 = vmul.f32 %v1090, %v918
    %v1107 = vmul.f32 %v1091, %v922
    %v1108 = vmul.f32 %v1092, %v928
    %v1109 = vmul.f32 %v1093, %v932
    %v1110 = vmul.f32 %v1094, %v938
    %v1111 = vmul.f32 %v1095, %v942
    %v1112 = vmul.f32 %v1096, %v948
    %v1113 = vmul.f32 %v1097, %v952
    %v1114 = vmul.f32 %v1098, %v958
    %v1115 = vmul.f32 %v1099, %v962
    %v1116 = vmul.f32 %v1100, %v968
    %v1117 = vmul.f32 %v1101, %v972
    %v1118 = vmul.f32 %v1102, %v978
    %v1119 = vmul.f32 %v1103, %v982
    %v1120 = vmul.f32 %v1104, %v988
    %v1121 = vmul.f32 %v1105, %v992
    %v1122 = vpack.c.bf16 %v1107, %v1106
    %v1123 = vpack.c.bf16 %v1109, %v1108
    %v1124 = vpack.c.bf16 %v1111, %v1110
    %v1125 = vpack.c.bf16 %v1113, %v1112
    %v1126 = vpack.c.bf16 %v1115, %v1114
    %v1127 = vpack.c.bf16 %v1117, %v1116
    %v1128 = vpack.c.bf16 %v1119, %v1118
    %v1129 = vpack.c.bf16 %v1121, %v1120
    %v1130 = vld [vmem:[#allocation11] sm:$0xf]
    %v1131 = vld [vmem:[#allocation11 + $0x4] sm:$0xf]
    %v1132 = vld [vmem:[#allocation11 + $0x8] sm:$0xf]
    %v1133 = vld [vmem:[#allocation11 + $0xc] sm:$0xf]
    %v1134 = vld [vmem:[#allocation11 + $0x10] sm:$0xf]
    %v1135 = vld [vmem:[#allocation11 + $0x14] sm:$0xf]
    %v1136 = vld [vmem:[#allocation11 + $0x18] sm:$0xf]
    %v1137 = vld [vmem:[#allocation11 + $0x1c] sm:$0xf]
    %v1138 = vld [vmem:[#allocation11 + $0x20] sm:$0xf]
    %v1139 = vld [vmem:[#allocation11 + $0x24] sm:$0xf]
    %v1140 = vld [vmem:[#allocation11 + $0x28] sm:$0xf]
    %v1141 = vld [vmem:[#allocation11 + $0x2c] sm:$0xf]
    %v1142 = vld [vmem:[#allocation11 + $0x30] sm:$0xf]
    %v1143 = vld [vmem:[#allocation11 + $0x34] sm:$0xf]
    %v1144 = vld [vmem:[#allocation11 + $0x38] sm:$0xf]
    %v1145 = vld [vmem:[#allocation11 + $0x3c] sm:$0xf]
    %v1146 = vld [vmem:[%s9] sm:$0x1]
    %v1148 = vlaneseq
    %v1149 = vshrl.u32 %v1148, 7
    %v1150 = vsub.s32 0, %v1149
    %v1151 = vrot.slane %v1146, %v1150
    %v1169 = vunpack.c.l.b16 %v1130
    %v1170 = vunpack.c.l.b16 %v1131
    %v1171 = vunpack.c.l.b16 %v1132
    %v1172 = vunpack.c.l.b16 %v1133
    %v1173 = vunpack.c.l.b16 %v1134
    %v1174 = vunpack.c.l.b16 %v1135
    %v1175 = vunpack.c.l.b16 %v1136
    %v1176 = vunpack.c.l.b16 %v1137
    %v1177 = vunpack.c.l.b16 %v1138
    %v1178 = vunpack.c.l.b16 %v1139
    %v1179 = vunpack.c.l.b16 %v1140
    %v1180 = vunpack.c.l.b16 %v1141
    %v1181 = vunpack.c.l.b16 %v1142
    %v1182 = vunpack.c.l.b16 %v1143
    %v1183 = vunpack.c.l.b16 %v1144
    %v1184 = vunpack.c.l.b16 %v1145
    %v1185 = vpack.c.b16 %v1170, %v1169
    %v1186 = vpack.c.b16 %v1172, %v1171
    %v1187 = vpack.c.b16 %v1174, %v1173
    %v1188 = vpack.c.b16 %v1176, %v1175
    %v1189 = vpack.c.b16 %v1178, %v1177
    %v1190 = vpack.c.b16 %v1180, %v1179
    %v1191 = vpack.c.b16 %v1182, %v1181
    %v1192 = vpack.c.b16 %v1184, %v1183
    %1201 = vmatprep.subr.bf16.mxu0 0
    %1202 = vmatpush1.bf16.msra.mxu0 %v1185
    %1203 = vmatprep.subr.bf16.mxu0 0
    %1204 = vmatpush1.bf16.msra.mxu0 %v1186
    %1205 = vmatprep.subr.bf16.mxu0 0
    %1206 = vmatpush1.bf16.msra.mxu0 %v1187
    %1207 = vmatprep.subr.bf16.mxu0 0
    %1208 = vmatpush1.bf16.msra.mxu0 %v1188
    %1209 = vmatprep.subr.bf16.mxu0 0
    %1210 = vmatpush1.bf16.msra.mxu0 %v1189
    %1211 = vmatprep.subr.bf16.mxu0 0
    %1212 = vmatpush1.bf16.msra.mxu0 %v1190
    %1213 = vmatprep.subr.bf16.mxu0 0
    %1214 = vmatpush1.bf16.msra.mxu0 %v1191
    %1215 = vmatprep.subr.bf16.mxu0 0
    %1216 = vmatpush1.bf16.msra.mxu0 %v1192
    %1217 = vmatprep.subr.bf16.mxu0 0
    %1218 = vmatpush1.bf16.msra.mxu0 0
    %1219 = vmatprep.subr.bf16.mxu0 0
    %1220 = vmatpush1.bf16.msra.mxu0 0
    %1221 = vmatprep.subr.bf16.mxu0 0
    %1222 = vmatpush1.bf16.msra.mxu0 0
    %1223 = vmatprep.subr.bf16.mxu0 0
    %1224 = vmatpush1.bf16.msra.mxu0 0
    %1225 = vmatprep.subr.bf16.mxu0 0
    %1226 = vmatpush1.bf16.msra.mxu0 0
    %1227 = vmatprep.subr.bf16.mxu0 0
    %1228 = vmatpush1.bf16.msra.mxu0 0
    %1229 = vmatprep.subr.bf16.mxu0 0
    %1230 = vmatpush1.bf16.msra.mxu0 0
    %1231 = vmatprep.subr.bf16.mxu0 0
    %1232 = vmatpush1.bf16.msra.mxu0 0
    %1233 = vmatprep.mubr.bf16.mxu0 0
    %1234 = vmatmul.mubr.bf16.gmra.mrb[0].mxu0 %v1122
    %v1235 = vpop.f32.mrb[0].mxu0
    %v1236 = vadd.f32 %v1151, %v1235
    %v1237 = vpop.f32.mrb[0].mxu0
    %v1238 = vpop.f32.mrb[0].mxu0
    %v1239 = vadd.f32 %v1151, %v1238
    %v1240 = vpop.f32.mrb[0].mxu0
    %1241 = vmatprep.mubr.bf16.mxu0 0
    %1242 = vmatmul.mubr.bf16.gmra.mrb[0].mxu0 %v1123
    %v1243 = vpop.f32.mrb[0].mxu0
    %v1244 = vadd.f32 %v1151, %v1243
    %v1245 = vpop.f32.mrb[0].mxu0
    %v1246 = vpop.f32.mrb[0].mxu0
    %v1247 = vadd.f32 %v1151, %v1246
    %v1248 = vpop.f32.mrb[0].mxu0
    %1249 = vmatprep.mubr.bf16.mxu0 0
    %1250 = vmatmul.mubr.bf16.gmra.mrb[0].mxu0 %v1124
    %v1251 = vpop.f32.mrb[0].mxu0
    %v1252 = vadd.f32 %v1151, %v1251
    %v1253 = vpop.f32.mrb[0].mxu0
    %v1254 = vpop.f32.mrb[0].mxu0
    %v1255 = vadd.f32 %v1151, %v1254
    %v1256 = vpop.f32.mrb[0].mxu0
    %1257 = vmatprep.mubr.bf16.mxu0 0
    %1258 = vmatmul.mubr.bf16.gmra.mrb[0].mxu0 %v1125
    %v1259 = vpop.f32.mrb[0].mxu0
    %v1260 = vadd.f32 %v1151, %v1259
    %v1261 = vpop.f32.mrb[0].mxu0
    %v1262 = vpop.f32.mrb[0].mxu0
    %v1263 = vadd.f32 %v1151, %v1262
    %v1264 = vpop.f32.mrb[0].mxu0
    %1265 = vmatprep.mubr.bf16.mxu0 0
    %1266 = vmatmul.mubr.bf16.gmra.mrb[0].mxu0 %v1126
    %v1267 = vpop.f32.mrb[0].mxu0
    %v1268 = vadd.f32 %v1151, %v1267
    %v1269 = vpop.f32.mrb[0].mxu0
    %v1270 = vpop.f32.mrb[0].mxu0
    %v1271 = vadd.f32 %v1151, %v1270
    %v1272 = vpop.f32.mrb[0].mxu0
    %1273 = vmatprep.mubr.bf16.mxu0 0
    %1274 = vmatmul.mubr.bf16.gmra.mrb[0].mxu0 %v1127
    %v1275 = vpop.f32.mrb[0].mxu0
    %v1276 = vadd.f32 %v1151, %v1275
    %v1277 = vpop.f32.mrb[0].mxu0
    %v1278 = vpop.f32.mrb[0].mxu0
    %v1279 = vadd.f32 %v1151, %v1278
    %v1280 = vpop.f32.mrb[0].mxu0
    %1281 = vmatprep.mubr.bf16.mxu0 0
    %1282 = vmatmul.mubr.bf16.gmra.mrb[0].mxu0 %v1128
    %v1283 = vpop.f32.mrb[0].mxu0
    %v1284 = vadd.f32 %v1151, %v1283
    %v1285 = vpop.f32.mrb[0].mxu0
    %v1286 = vpop.f32.mrb[0].mxu0
    %v1287 = vadd.f32 %v1151, %v1286
    %v1288 = vpop.f32.mrb[0].mxu0
    %1289 = vmatprep.mubr.bf16.mxu0 0
    %1290 = vmatmul.mubr.bf16.gmra.mrb[0].mxu0 %v1129
    %v1291 = vpop.f32.mrb[0].mxu0
    %v1292 = vadd.f32 %v1151, %v1291
    %v1293 = vpop.f32.mrb[0].mxu0
    %v1294 = vpop.f32.mrb[0].mxu0
    %v1295 = vadd.f32 %v1151, %v1294
    %v1296 = vpop.f32.mrb[0].mxu0
    %1297 = vdwg.mxu0
    %v1298 = vmul.f32 %v647, %v1236
    %v1299 = vmul.f32 %v650, %v1239
    %v1300 = vmul.f32 %v655, %v1244
    %v1301 = vmul.f32 %v658, %v1247
    %v1302 = vmul.f32 %v663, %v1252
    %v1303 = vmul.f32 %v666, %v1255
    %v1304 = vmul.f32 %v671, %v1260
    %v1305 = vmul.f32 %v674, %v1263
    %v1306 = vmul.f32 %v679, %v1268
    %v1307 = vmul.f32 %v682, %v1271
    %v1308 = vmul.f32 %v687, %v1276
    %v1309 = vmul.f32 %v690, %v1279
    %v1310 = vmul.f32 %v695, %v1284
    %v1311 = vmul.f32 %v698, %v1287
    %v1312 = vmul.f32 %v703, %v1292
    %v1313 = vmul.f32 %v706, %v1295
    %v1314 = vpack.c.bf16 %v1299, %v1298
    %v1315 = vpack.c.bf16 %v1301, %v1300
    %v1316 = vpack.c.bf16 %v1303, %v1302
    %v1317 = vpack.c.bf16 %v1305, %v1304
    %v1318 = vpack.c.bf16 %v1307, %v1306
    %v1319 = vpack.c.bf16 %v1309, %v1308
    %v1320 = vpack.c.bf16 %v1311, %v1310
    %v1321 = vpack.c.bf16 %v1313, %v1312
    %1322 = vmatprep.subr.bf16.mxu0 0
    %1323 = vmatpush1.bf16.xpose.msra.mxu0 %v1314
    %1324 = vmatprep.subr.bf16.mxu0 0
    %1325 = vmatpush1.bf16.xpose.msra.mxu0 %v1315
    %1326 = vmatprep.subr.bf16.mxu0 0
    %1327 = vmatpush1.bf16.xpose.msra.mxu0 %v1316
    %1328 = vmatprep.subr.bf16.mxu0 0
    %1329 = vmatpush1.bf16.xpose.msra.mxu0 %v1317
    %1330 = vmatprep.subr.bf16.mxu0 0
    %1331 = vmatpush1.bf16.xpose.msra.mxu0 %v1318
    %1332 = vmatprep.subr.bf16.mxu0 0
    %1333 = vmatpush1.bf16.xpose.msra.mxu0 %v1319
    %1334 = vmatprep.subr.bf16.mxu0 0
    %1335 = vmatpush1.bf16.xpose.msra.mxu0 %v1320
    %1336 = vmatprep.subr.bf16.mxu0 0
    %1337 = vmatpush1.bf16.xpose.msra.mxu0 %v1321
    %1338 = vmatprep.subr.bf16.mxu0 0
    %1339 = vmatpush1.bf16.xpose.msra.mxu0 0
    %1340 = vmatprep.subr.bf16.mxu0 0
    %1341 = vmatpush1.bf16.xpose.msra.mxu0 0
    %1342 = vmatprep.subr.bf16.mxu0 0
    %1343 = vmatpush1.bf16.xpose.msra.mxu0 0
    %1344 = vmatprep.subr.bf16.mxu0 0
    %1345 = vmatpush1.bf16.xpose.msra.mxu0 0
    %1346 = vmatprep.subr.bf16.mxu0 0
    %1347 = vmatpush1.bf16.xpose.msra.mxu0 0
    %1348 = vmatprep.subr.bf16.mxu0 0
    %1349 = vmatpush1.bf16.xpose.msra.mxu0 0
    %1350 = vmatprep.subr.bf16.mxu0 0
    %1351 = vmatpush1.bf16.xpose.msra.mxu0 0
    %1352 = vmatprep.subr.bf16.mxu0 0
    %1353 = vmatpush1.bf16.xpose.msra.mxu0 0
    %1354 = vmatprep.mubr.bf16.mxu0 0
    %1355 = vmatmul.mubr.bf16.gmra.mrb[0].mxu0 1065369472
    %v1356 = vpop.f32.mrb[0].mxu0
    %v1357 = vadd.f32 0.0, %v1356
    %v1358 = vpop.f32.mrb[0].mxu0
    %v1359 = vpop.f32.mrb[0].mxu0
    %v1360 = vpop.f32.mrb[0].mxu0
    %1361 = vdwg.mxu0
    %1362 = vst [vmem:[#allocation13] sm:$0x1] %v1357
    // Predicated region
    $region66: #{tpu_custom_call.1} parent=1 // pred_check
      _
    $region67: #{tpu_custom_call.1} parent=1 // pred_check_branch
      %1364 = sbr.rel (0) target = $region69
    $region68: #{tpu_custom_call.1} parent=1 // pred_region
      %s1366 = ssub.s32 16, 16
      %1367 = vsyncadd [#allocation4], %s1366
      %s1369 = sshll.u32 [#allocation13], 4
      %s1370 = int_to_ptr.vmem [resolvable:$true] %s1369
      %1372 = dma.vmem_to_hbm [thread:$0]  %s1370, 16, %s10, [#allocation4]
    $region69: #{tpu_custom_call.1} parent=1 // pred_fallthru
      _
    // Predicated region
    $region70: #{tpu_custom_call.1} parent=1 // pred_check
      _
    $region71: #{tpu_custom_call.1} parent=1 // pred_check_branch
      %1374 = sbr.rel (0) target = $region73
    $region72: #{tpu_custom_call.1} parent=1 // pred_region
      %1375 = dma.done [#allocation4], 16
    $region73: #{tpu_custom_call.1} parent=1 // pred_fallthru
      _
    %1376 = vsyncpa [#allocation3], 1
    %1377 = vsyncpa [#allocation6], 1
    %1378 = vsyncpa [#allocation9], 1
    %1379 = vsyncpa [#allocation12], 1
    %1380 = vsyncpa [#allocation4], 1

</llo_original>
